<compile_context>
chip_gen: v5e
topology: v5e:2x2
jax: 0.10.0
libtpu: 0.0.40
codegen_flags: <defaults>
</compile_context>

<pallas_src>
import functools

import jax
import jax.numpy as jnp
from jax.experimental import pallas as pl
from jax.experimental.pallas import tpu as pltpu


def _round_up(x, m):
    return (x + m - 1) // m * m


def _conv_kernel(x_ref, w_ref, o_ref, p_ref, *, H, W, Cin, L2):
    """One padded image per grid step.

    x_ref: (1, Hp, Wp, Cin)    padded NHWC image (bf16)
    w_ref: (K_pad, Cout_pad)   lane-dense weight slab (bf16), VMEM resident
    o_ref: (1, H*W, Cout_pad)  lane-dense output tile (f32)
    p_ref: (H, W, K_pad)       VMEM scratch: the im2col patch tile (bf16)
    """
    # Zero the scratch once so the K-padding columns hold 0 instead of stale
    # VMEM bits (stale NaN * 0 == NaN would corrupt every output column).
    @pl.when(pl.program_id(0) == 0)
    def _():
        p_ref[...] = jnp.zeros_like(p_ref)

    # im2col inside the kernel: L2*L2 static slices, VMEM -> VMEM (cheap).
    for kh in range(L2):
        for kw in range(L2):
            c0 = (kh * L2 + kw) * Cin
            p_ref[:, :, c0:c0 + Cin] = x_ref[0, kh:kh + H, kw:kw + W, :]

    # One big lane-dense MXU matmul: (H*W, K_pad) x (K_pad, Cout_pad), f32 acc.
    patches = p_ref[...].reshape(H * W, p_ref.shape[-1])
    o_ref[0, :, :] = jnp.dot(
        patches, w_ref[...], preferred_element_type=jnp.float32
    ).astype(o_ref.dtype)


def conv2d_same_pallas(x_nchw, w_oihw):
    """Matches nn.Conv2d(Cin, Cout, kernel_size=L2, bias=False, padding=L2//2)
    for odd L2 (the module uses odd L2).  bf16 operands, f32 accumulation."""
    N, Cin, H, W = x_nchw.shape
    Cout, Cin_w, L2, L2_w = w_oihw.shape
    assert Cin == Cin_w and L2 == L2_w
    assert L2 % 2 == 1, "even L2 changes PyTorch 'same' output size; unsupported"
    pad = L2 // 2
    Hp, Wp = H + 2 * pad, W + 2 * pad

    K = L2 * L2 * Cin
    k_pad = _round_up(K, 128)        # full MXU contraction / lane-dense rows
    cout_pad = _round_up(Cout, 128)  # unmasked (full-lane) result stores
    HW = H * W

    # ---- wrapper glue (layout only; the conv itself runs in the kernel) ----
    x_nhwc = jnp.transpose(x_nchw, (0, 2, 3, 1)).astype(jnp.bfloat16)
    x_padded = jnp.pad(x_nhwc, ((0, 0), (pad, pad), (pad, pad), (0, 0)))

    # Weights: OIHW -> (kh, kw, Cin, Cout) -> (K, Cout), zero-padded to
    # (K_pad, Cout_pad).  Zero K rows make the scratch's K padding inert.
    w2d = jnp.transpose(w_oihw, (2, 3, 1, 0)).reshape(K, Cout)
    w2d = w2d.astype(jnp.bfloat16)
    w2d = jnp.pad(w2d, ((0, k_pad - K), (0, cout_pad - Cout)))

    kernel = functools.partial(_conv_kernel, H=H, W=W, Cin=Cin, L2=L2)

    # VMEM use (double-buffered image/output tiles + resident weight slab +
    # patch scratch) is tiny at these sizes; the limit is stated explicitly so
    # larger shapes don't silently hit the per-generation scoped defaults
    # (16 MiB v5e / 32 MiB v6e+v7x).  32 MiB is safe on every generation.
    # TODO(synk): the full-size module (Cin=477, L2=17 -> K~138k) needs a
    # K-tiled accumulator variant; the weight slab alone would not fit VMEM.
    vmem_bytes = 32 * 1024 * 1024

    cost = pl.CostEstimate(
        flops=2 * N * HW * k_pad * cout_pad,
        transcendentals=0,
        bytes_accessed=int(x_padded.size) * 2 + int(w2d.size) * 2
        + N * HW * cout_pad * 4,
    )

    out = pl.pallas_call(
        kernel,
        out_shape=jax.ShapeDtypeStruct((N, HW, cout_pad), jnp.float32),
        grid_spec=pltpu.PrefetchScalarGridSpec(
            num_scalar_prefetch=0,
            grid=(N,),
            in_specs=[
                pl.BlockSpec((1, Hp, Wp, Cin), lambda n: (n, 0, 0, 0)),
                pl.BlockSpec((k_pad, cout_pad), lambda n: (0, 0)),  # resident
            ],
            out_specs=pl.BlockSpec((1, HW, cout_pad), lambda n: (n, 0, 0)),
            scratch_shapes=[pltpu.VMEM((H, W, k_pad), jnp.bfloat16)],
        ),
        compiler_params=pltpu.CompilerParams(
            dimension_semantics=("parallel",),
            vmem_limit_bytes=vmem_bytes,
        ),
        cost_estimate=cost,
    )(x_padded, w2d)

    # ---- glue: strip Cout padding, back to PyTorch NCHW convention ----
    out = out[:, :, :Cout].reshape(N, H, W, Cout)
    return jnp.transpose(out, (0, 3, 1, 2))


class OneCnvFModelPallas:
    """JAX/Pallas port of oneCnvFModel.forward (only frwdApPadd is used there)."""

    # TODO(synk): isra()/trnspApPadd/haarPLF are never invoked by forward(); not ported.
    def __init__(self, key, nDepths=2, s=2, V=51, NxN=16, haarL=8, L2=5,
                 dtype=jnp.float32):
        self.nDepths, self.s, self.NxN, self.L2 = nDepths, s, NxN, L2
        cin = nDepths * s * s
        # deterministic synthetic weights (shape matches nn.Conv2d(cin, NxN, L2))
        fan_in = cin * L2 * L2
        self.frwd_w = (jax.random.normal(key, (NxN, cin, L2, L2), dtype)
                       / jnp.sqrt(jnp.asarray(fan_in, dtype)))

    def forward(self, x):
        return conv2d_same_pallas(x, self.frwd_w)


if __name__ == "__main__":
    key = jax.random.PRNGKey(0)
    k_w, k_x = jax.random.split(key)

    # small shapes consistent with the module: Cin = nDepths*s*s = 8, Cout = NxN = 16
    nDepths, s, NxN, L2 = 2, 2, 16, 5
    N, H, W = 2, 8, 8
    Cin = nDepths * s * s

    model = OneCnvFModelPallas(k_w, nDepths=nDepths, s=s, NxN=NxN, L2=L2)
    x = jax.random.normal(k_x, (N, Cin, H, W), jnp.float32)

    out = jax.block_until_ready(model.forward(x))
    assert out.shape == (N, NxN, H, W)

    # Correctness: the kernel uses bf16 operands with f32 accumulation, so the
    # tight check compares against an f32 reference conv evaluated on the SAME
    # bf16-rounded operands (remaining differences are accumulation-order only).
    x_r = x.astype(jnp.bfloat16).astype(jnp.float32)
    w_r = model.frwd_w.astype(jnp.bfloat16).astype(jnp.float32)
    ref = jax.lax.conv_general_dilated(
        x_r, w_r, window_strides=(1, 1), padding="SAME",
        dimension_numbers=("NCHW", "OIHW", "NCHW"),
        precision=jax.lax.Precision.HIGHEST)
    assert jnp.allclose(out, ref, atol=1e-3, rtol=1e-3), float(
        jnp.max(jnp.abs(out - ref)))

    # Looser sanity check against the original f32 module semantics (bounds the
    # bf16 input-rounding error).
    ref_f32 = jax.lax.conv_general_dilated(
        x, model.frwd_w, window_strides=(1, 1), padding="SAME",
        dimension_numbers=("NCHW", "OIHW", "NCHW"),
        precision=jax.lax.Precision.HIGHEST)
    assert jnp.allclose(out, ref_f32, atol=1e-1, rtol=1e-1)

    print("KERNEL_OK")
</pallas_src>

<mosaic_0001>
module attributes {stable_mosaic.version = 11 : i64} {
  func.func @_conv_kernel(%arg0: i32, %arg1: memref<1x12x12x8xbf16, #tpu.memory_space<vmem>>, %arg2: memref<256x128xbf16, #tpu.memory_space<vmem>>, %arg3: memref<1x64x128xf32, #tpu.memory_space<vmem>>, %arg4: memref<8x8x256xbf16, #tpu.memory_space<vmem>>) attributes {dimension_semantics = [#tpu.dimension_semantics<parallel>], iteration_bounds = array<i64: 2>, scalar_prefetch = 0 : i64, scratch_operands = 1 : i64, tpu.core_type = #tpu.core_type<tc>, window_params = [{transform_indices = @transform_0, window_bounds = array<i64: 1, 12, 12, 8>}, {pipeline_mode = #tpu.pipeline_mode<synchronous>, transform_indices = @transform_1, window_bounds = array<i64: 256, 128>}, {transform_indices = @transform_2, window_bounds = array<i64: 1, 64, 128>}]} {
    %c0_i32 = arith.constant 0 : i32
    %0 = arith.cmpi eq, %arg0, %c0_i32 : i32
    %1 = arith.extui %0 : i1 to i32
    %c0_i32_0 = arith.constant 0 : i32
    %2 = arith.cmpi ne, %1, %c0_i32_0 : i32
    scf.if %2 {
      %cst_155 = arith.constant 0.000000e+00 : bf16
      %85 = vector.broadcast %cst_155 : bf16 to vector<8x8x256xbf16>
      %c0_156 = arith.constant 0 : index
      %c0_157 = arith.constant 0 : index
      %c0_158 = arith.constant 0 : index
      %86 = vector.load %arg4[%c0_156, %c0_157, %c0_158] : memref<8x8x256xbf16, #tpu.memory_space<vmem>>, vector<8x8x256xbf16>
      tpu.vector_store %arg4[%c0_156, %c0_157, %c0_158], %85 {strides = array<i32>} : memref<8x8x256xbf16, #tpu.memory_space<vmem>>, vector<8x8x256xbf16>,
    } else {
    }
    %c0 = arith.constant 0 : index
    %c0_1 = arith.constant 0 : index
    %c0_2 = arith.constant 0 : index
    %c0_3 = arith.constant 0 : index
    %3 = vector.load %arg1[%c0, %c0_1, %c0_2, %c0_3] : memref<1x12x12x8xbf16, #tpu.memory_space<vmem>>, vector<1x8x8x8xbf16>
    %4 = vector.shape_cast %3 : vector<1x8x8x8xbf16> to vector<8x8x8xbf16>
    %c0_4 = arith.constant 0 : index
    %c0_5 = arith.constant 0 : index
    %c0_6 = arith.constant 0 : index
    %5 = vector.load %arg4[%c0_4, %c0_5, %c0_6] : memref<8x8x256xbf16, #tpu.memory_space<vmem>>, vector<8x8x8xbf16>
    tpu.vector_store %arg4[%c0_4, %c0_5, %c0_6], %4 {strides = array<i32>} : memref<8x8x256xbf16, #tpu.memory_space<vmem>>, vector<8x8x8xbf16>,
    %c0_7 = arith.constant 0 : index
    %c0_8 = arith.constant 0 : index
    %c1 = arith.constant 1 : index
    %c0_9 = arith.constant 0 : index
    %6 = vector.load %arg1[%c0_7, %c0_8, %c1, %c0_9] : memref<1x12x12x8xbf16, #tpu.memory_space<vmem>>, vector<1x8x8x8xbf16>
    %7 = vector.shape_cast %6 : vector<1x8x8x8xbf16> to vector<8x8x8xbf16>
    %c0_10 = arith.constant 0 : index
    %c0_11 = arith.constant 0 : index
    %c8 = arith.constant 8 : index
    %8 = vector.load %arg4[%c0_10, %c0_11, %c8] : memref<8x8x256xbf16, #tpu.memory_space<vmem>>, vector<8x8x8xbf16>
    tpu.vector_store %arg4[%c0_10, %c0_11, %c8], %7 {strides = array<i32>} : memref<8x8x256xbf16, #tpu.memory_space<vmem>>, vector<8x8x8xbf16>,
    %c0_12 = arith.constant 0 : index
    %c0_13 = arith.constant 0 : index
    %c2 = arith.constant 2 : index
    %c0_14 = arith.constant 0 : index
    %9 = vector.load %arg1[%c0_12, %c0_13, %c2, %c0_14] : memref<1x12x12x8xbf16, #tpu.memory_space<vmem>>, vector<1x8x8x8xbf16>
    %10 = vector.shape_cast %9 : vector<1x8x8x8xbf16> to vector<8x8x8xbf16>
    %c0_15 = arith.constant 0 : index
    %c0_16 = arith.constant 0 : index
    %c16 = arith.constant 16 : index
    %11 = vector.load %arg4[%c0_15, %c0_16, %c16] : memref<8x8x256xbf16, #tpu.memory_space<vmem>>, vector<8x8x8xbf16>
    tpu.vector_store %arg4[%c0_15, %c0_16, %c16], %10 {strides = array<i32>} : memref<8x8x256xbf16, #tpu.memory_space<vmem>>, vector<8x8x8xbf16>,
    %c0_17 = arith.constant 0 : index
    %c0_18 = arith.constant 0 : index
    %c3 = arith.constant 3 : index
    %c0_19 = arith.constant 0 : index
    %12 = vector.load %arg1[%c0_17, %c0_18, %c3, %c0_19] : memref<1x12x12x8xbf16, #tpu.memory_space<vmem>>, vector<1x8x8x8xbf16>
    %13 = vector.shape_cast %12 : vector<1x8x8x8xbf16> to vector<8x8x8xbf16>
    %c0_20 = arith.constant 0 : index
    %c0_21 = arith.constant 0 : index
    %c24 = arith.constant 24 : index
    %14 = vector.load %arg4[%c0_20, %c0_21, %c24] : memref<8x8x256xbf16, #tpu.memory_space<vmem>>, vector<8x8x8xbf16>
    tpu.vector_store %arg4[%c0_20, %c0_21, %c24], %13 {strides = array<i32>} : memref<8x8x256xbf16, #tpu.memory_space<vmem>>, vector<8x8x8xbf16>,
    %c0_22 = arith.constant 0 : index
    %c0_23 = arith.constant 0 : index
    %c4 = arith.constant 4 : index
    %c0_24 = arith.constant 0 : index
    %15 = vector.load %arg1[%c0_22, %c0_23, %c4, %c0_24] : memref<1x12x12x8xbf16, #tpu.memory_space<vmem>>, vector<1x8x8x8xbf16>
    %16 = vector.shape_cast %15 : vector<1x8x8x8xbf16> to vector<8x8x8xbf16>
    %c0_25 = arith.constant 0 : index
    %c0_26 = arith.constant 0 : index
    %c32 = arith.constant 32 : index
    %17 = vector.load %arg4[%c0_25, %c0_26, %c32] : memref<8x8x256xbf16, #tpu.memory_space<vmem>>, vector<8x8x8xbf16>
    tpu.vector_store %arg4[%c0_25, %c0_26, %c32], %16 {strides = array<i32>} : memref<8x8x256xbf16, #tpu.memory_space<vmem>>, vector<8x8x8xbf16>,
    %c0_27 = arith.constant 0 : index
    %c1_28 = arith.constant 1 : index
    %c0_29 = arith.constant 0 : index
    %c0_30 = arith.constant 0 : index
    %18 = vector.load %arg1[%c0_27, %c1_28, %c0_29, %c0_30] : memref<1x12x12x8xbf16, #tpu.memory_space<vmem>>, vector<1x8x8x8xbf16>
    %19 = vector.shape_cast %18 : vector<1x8x8x8xbf16> to vector<8x8x8xbf16>
    %c0_31 = arith.constant 0 : index
    %c0_32 = arith.constant 0 : index
    %c40 = arith.constant 40 : index
    %20 = vector.load %arg4[%c0_31, %c0_32, %c40] : memref<8x8x256xbf16, #tpu.memory_space<vmem>>, vector<8x8x8xbf16>
    tpu.vector_store %arg4[%c0_31, %c0_32, %c40], %19 {strides = array<i32>} : memref<8x8x256xbf16, #tpu.memory_space<vmem>>, vector<8x8x8xbf16>,
    %c0_33 = arith.constant 0 : index
    %c1_34 = arith.constant 1 : index
    %c1_35 = arith.constant 1 : index
    %c0_36 = arith.constant 0 : index
    %21 = vector.load %arg1[%c0_33, %c1_34, %c1_35, %c0_36] : memref<1x12x12x8xbf16, #tpu.memory_space<vmem>>, vector<1x8x8x8xbf16>
    %22 = vector.shape_cast %21 : vector<1x8x8x8xbf16> to vector<8x8x8xbf16>
    %c0_37 = arith.constant 0 : index
    %c0_38 = arith.constant 0 : index
    %c48 = arith.constant 48 : index
    %23 = vector.load %arg4[%c0_37, %c0_38, %c48] : memref<8x8x256xbf16, #tpu.memory_space<vmem>>, vector<8x8x8xbf16>
    tpu.vector_store %arg4[%c0_37, %c0_38, %c48], %22 {strides = array<i32>} : memref<8x8x256xbf16, #tpu.memory_space<vmem>>, vector<8x8x8xbf16>,
    %c0_39 = arith.constant 0 : index
    %c1_40 = arith.constant 1 : index
    %c2_41 = arith.constant 2 : index
    %c0_42 = arith.constant 0 : index
    %24 = vector.load %arg1[%c0_39, %c1_40, %c2_41, %c0_42] : memref<1x12x12x8xbf16, #tpu.memory_space<vmem>>, vector<1x8x8x8xbf16>
    %25 = vector.shape_cast %24 : vector<1x8x8x8xbf16> to vector<8x8x8xbf16>
    %c0_43 = arith.constant 0 : index
    %c0_44 = arith.constant 0 : index
    %c56 = arith.constant 56 : index
    %26 = vector.load %arg4[%c0_43, %c0_44, %c56] : memref<8x8x256xbf16, #tpu.memory_space<vmem>>, vector<8x8x8xbf16>
    tpu.vector_store %arg4[%c0_43, %c0_44, %c56], %25 {strides = array<i32>} : memref<8x8x256xbf16, #tpu.memory_space<vmem>>, vector<8x8x8xbf16>,
    %c0_45 = arith.constant 0 : index
    %c1_46 = arith.constant 1 : index
    %c3_47 = arith.constant 3 : index
    %c0_48 = arith.constant 0 : index
    %27 = vector.load %arg1[%c0_45, %c1_46, %c3_47, %c0_48] : memref<1x12x12x8xbf16, #tpu.memory_space<vmem>>, vector<1x8x8x8xbf16>
    %28 = vector.shape_cast %27 : vector<1x8x8x8xbf16> to vector<8x8x8xbf16>
    %c0_49 = arith.constant 0 : index
    %c0_50 = arith.constant 0 : index
    %c64 = arith.constant 64 : index
    %29 = vector.load %arg4[%c0_49, %c0_50, %c64] : memref<8x8x256xbf16, #tpu.memory_space<vmem>>, vector<8x8x8xbf16>
    tpu.vector_store %arg4[%c0_49, %c0_50, %c64], %28 {strides = array<i32>} : memref<8x8x256xbf16, #tpu.memory_space<vmem>>, vector<8x8x8xbf16>,
    %c0_51 = arith.constant 0 : index
    %c1_52 = arith.constant 1 : index
    %c4_53 = arith.constant 4 : index
    %c0_54 = arith.constant 0 : index
    %30 = vector.load %arg1[%c0_51, %c1_52, %c4_53, %c0_54] : memref<1x12x12x8xbf16, #tpu.memory_space<vmem>>, vector<1x8x8x8xbf16>
    %31 = vector.shape_cast %30 : vector<1x8x8x8xbf16> to vector<8x8x8xbf16>
    %c0_55 = arith.constant 0 : index
    %c0_56 = arith.constant 0 : index
    %c72 = arith.constant 72 : index
    %32 = vector.load %arg4[%c0_55, %c0_56, %c72] : memref<8x8x256xbf16, #tpu.memory_space<vmem>>, vector<8x8x8xbf16>
    tpu.vector_store %arg4[%c0_55, %c0_56, %c72], %31 {strides = array<i32>} : memref<8x8x256xbf16, #tpu.memory_space<vmem>>, vector<8x8x8xbf16>,
    %c0_57 = arith.constant 0 : index
    %c2_58 = arith.constant 2 : index
    %c0_59 = arith.constant 0 : index
    %c0_60 = arith.constant 0 : index
    %33 = vector.load %arg1[%c0_57, %c2_58, %c0_59, %c0_60] : memref<1x12x12x8xbf16, #tpu.memory_space<vmem>>, vector<1x8x8x8xbf16>
    %34 = vector.shape_cast %33 : vector<1x8x8x8xbf16> to vector<8x8x8xbf16>
    %c0_61 = arith.constant 0 : index
    %c0_62 = arith.constant 0 : index
    %c80 = arith.constant 80 : index
    %35 = vector.load %arg4[%c0_61, %c0_62, %c80] : memref<8x8x256xbf16, #tpu.memory_space<vmem>>, vector<8x8x8xbf16>
    tpu.vector_store %arg4[%c0_61, %c0_62, %c80], %34 {strides = array<i32>} : memref<8x8x256xbf16, #tpu.memory_space<vmem>>, vector<8x8x8xbf16>,
    %c0_63 = arith.constant 0 : index
    %c2_64 = arith.constant 2 : index
    %c1_65 = arith.constant 1 : index
    %c0_66 = arith.constant 0 : index
    %36 = vector.load %arg1[%c0_63, %c2_64, %c1_65, %c0_66] : memref<1x12x12x8xbf16, #tpu.memory_space<vmem>>, vector<1x8x8x8xbf16>
    %37 = vector.shape_cast %36 : vector<1x8x8x8xbf16> to vector<8x8x8xbf16>
    %c0_67 = arith.constant 0 : index
    %c0_68 = arith.constant 0 : index
    %c88 = arith.constant 88 : index
    %38 = vector.load %arg4[%c0_67, %c0_68, %c88] : memref<8x8x256xbf16, #tpu.memory_space<vmem>>, vector<8x8x8xbf16>
    tpu.vector_store %arg4[%c0_67, %c0_68, %c88], %37 {strides = array<i32>} : memref<8x8x256xbf16, #tpu.memory_space<vmem>>, vector<8x8x8xbf16>,
    %c0_69 = arith.constant 0 : index
    %c2_70 = arith.constant 2 : index
    %c2_71 = arith.constant 2 : index
    %c0_72 = arith.constant 0 : index
    %39 = vector.load %arg1[%c0_69, %c2_70, %c2_71, %c0_72] : memref<1x12x12x8xbf16, #tpu.memory_space<vmem>>, vector<1x8x8x8xbf16>
    %40 = vector.shape_cast %39 : vector<1x8x8x8xbf16> to vector<8x8x8xbf16>
    %c0_73 = arith.constant 0 : index
    %c0_74 = arith.constant 0 : index
    %c96 = arith.constant 96 : index
    %41 = vector.load %arg4[%c0_73, %c0_74, %c96] : memref<8x8x256xbf16, #tpu.memory_space<vmem>>, vector<8x8x8xbf16>
    tpu.vector_store %arg4[%c0_73, %c0_74, %c96], %40 {strides = array<i32>} : memref<8x8x256xbf16, #tpu.memory_space<vmem>>, vector<8x8x8xbf16>,
    %c0_75 = arith.constant 0 : index
    %c2_76 = arith.constant 2 : index
    %c3_77 = arith.constant 3 : index
    %c0_78 = arith.constant 0 : index
    %42 = vector.load %arg1[%c0_75, %c2_76, %c3_77, %c0_78] : memref<1x12x12x8xbf16, #tpu.memory_space<vmem>>, vector<1x8x8x8xbf16>
    %43 = vector.shape_cast %42 : vector<1x8x8x8xbf16> to vector<8x8x8xbf16>
    %c0_79 = arith.constant 0 : index
    %c0_80 = arith.constant 0 : index
    %c104 = arith.constant 104 : index
    %44 = vector.load %arg4[%c0_79, %c0_80, %c104] : memref<8x8x256xbf16, #tpu.memory_space<vmem>>, vector<8x8x8xbf16>
    tpu.vector_store %arg4[%c0_79, %c0_80, %c104], %43 {strides = array<i32>} : memref<8x8x256xbf16, #tpu.memory_space<vmem>>, vector<8x8x8xbf16>,
    %c0_81 = arith.constant 0 : index
    %c2_82 = arith.constant 2 : index
    %c4_83 = arith.constant 4 : index
    %c0_84 = arith.constant 0 : index
    %45 = vector.load %arg1[%c0_81, %c2_82, %c4_83, %c0_84] : memref<1x12x12x8xbf16, #tpu.memory_space<vmem>>, vector<1x8x8x8xbf16>
    %46 = vector.shape_cast %45 : vector<1x8x8x8xbf16> to vector<8x8x8xbf16>
    %c0_85 = arith.constant 0 : index
    %c0_86 = arith.constant 0 : index
    %c112 = arith.constant 112 : index
    %47 = vector.load %arg4[%c0_85, %c0_86, %c112] : memref<8x8x256xbf16, #tpu.memory_space<vmem>>, vector<8x8x8xbf16>
    tpu.vector_store %arg4[%c0_85, %c0_86, %c112], %46 {strides = array<i32>} : memref<8x8x256xbf16, #tpu.memory_space<vmem>>, vector<8x8x8xbf16>,
    %c0_87 = arith.constant 0 : index
    %c3_88 = arith.constant 3 : index
    %c0_89 = arith.constant 0 : index
    %c0_90 = arith.constant 0 : index
    %48 = vector.load %arg1[%c0_87, %c3_88, %c0_89, %c0_90] : memref<1x12x12x8xbf16, #tpu.memory_space<vmem>>, vector<1x8x8x8xbf16>
    %49 = vector.shape_cast %48 : vector<1x8x8x8xbf16> to vector<8x8x8xbf16>
    %c0_91 = arith.constant 0 : index
    %c0_92 = arith.constant 0 : index
    %c120 = arith.constant 120 : index
    %50 = vector.load %arg4[%c0_91, %c0_92, %c120] : memref<8x8x256xbf16, #tpu.memory_space<vmem>>, vector<8x8x8xbf16>
    tpu.vector_store %arg4[%c0_91, %c0_92, %c120], %49 {strides = array<i32>} : memref<8x8x256xbf16, #tpu.memory_space<vmem>>, vector<8x8x8xbf16>,
    %c0_93 = arith.constant 0 : index
    %c3_94 = arith.constant 3 : index
    %c1_95 = arith.constant 1 : index
    %c0_96 = arith.constant 0 : index
    %51 = vector.load %arg1[%c0_93, %c3_94, %c1_95, %c0_96] : memref<1x12x12x8xbf16, #tpu.memory_space<vmem>>, vector<1x8x8x8xbf16>
    %52 = vector.shape_cast %51 : vector<1x8x8x8xbf16> to vector<8x8x8xbf16>
    %c0_97 = arith.constant 0 : index
    %c0_98 = arith.constant 0 : index
    %c128 = arith.constant 128 : index
    %53 = vector.load %arg4[%c0_97, %c0_98, %c128] : memref<8x8x256xbf16, #tpu.memory_space<vmem>>, vector<8x8x8xbf16>
    tpu.vector_store %arg4[%c0_97, %c0_98, %c128], %52 {strides = array<i32>} : memref<8x8x256xbf16, #tpu.memory_space<vmem>>, vector<8x8x8xbf16>,
    %c0_99 = arith.constant 0 : index
    %c3_100 = arith.constant 3 : index
    %c2_101 = arith.constant 2 : index
    %c0_102 = arith.constant 0 : index
    %54 = vector.load %arg1[%c0_99, %c3_100, %c2_101, %c0_102] : memref<1x12x12x8xbf16, #tpu.memory_space<vmem>>, vector<1x8x8x8xbf16>
    %55 = vector.shape_cast %54 : vector<1x8x8x8xbf16> to vector<8x8x8xbf16>
    %c0_103 = arith.constant 0 : index
    %c0_104 = arith.constant 0 : index
    %c136 = arith.constant 136 : index
    %56 = vector.load %arg4[%c0_103, %c0_104, %c136] : memref<8x8x256xbf16, #tpu.memory_space<vmem>>, vector<8x8x8xbf16>
    tpu.vector_store %arg4[%c0_103, %c0_104, %c136], %55 {strides = array<i32>} : memref<8x8x256xbf16, #tpu.memory_space<vmem>>, vector<8x8x8xbf16>,
    %c0_105 = arith.constant 0 : index
    %c3_106 = arith.constant 3 : index
    %c3_107 = arith.constant 3 : index
    %c0_108 = arith.constant 0 : index
    %57 = vector.load %arg1[%c0_105, %c3_106, %c3_107, %c0_108] : memref<1x12x12x8xbf16, #tpu.memory_space<vmem>>, vector<1x8x8x8xbf16>
    %58 = vector.shape_cast %57 : vector<1x8x8x8xbf16> to vector<8x8x8xbf16>
    %c0_109 = arith.constant 0 : index
    %c0_110 = arith.constant 0 : index
    %c144 = arith.constant 144 : index
    %59 = vector.load %arg4[%c0_109, %c0_110, %c144] : memref<8x8x256xbf16, #tpu.memory_space<vmem>>, vector<8x8x8xbf16>
    tpu.vector_store %arg4[%c0_109, %c0_110, %c144], %58 {strides = array<i32>} : memref<8x8x256xbf16, #tpu.memory_space<vmem>>, vector<8x8x8xbf16>,
    %c0_111 = arith.constant 0 : index
    %c3_112 = arith.constant 3 : index
    %c4_113 = arith.constant 4 : index
    %c0_114 = arith.constant 0 : index
    %60 = vector.load %arg1[%c0_111, %c3_112, %c4_113, %c0_114] : memref<1x12x12x8xbf16, #tpu.memory_space<vmem>>, vector<1x8x8x8xbf16>
    %61 = vector.shape_cast %60 : vector<1x8x8x8xbf16> to vector<8x8x8xbf16>
    %c0_115 = arith.constant 0 : index
    %c0_116 = arith.constant 0 : index
    %c152 = arith.constant 152 : index
    %62 = vector.load %arg4[%c0_115, %c0_116, %c152] : memref<8x8x256xbf16, #tpu.memory_space<vmem>>, vector<8x8x8xbf16>
    tpu.vector_store %arg4[%c0_115, %c0_116, %c152], %61 {strides = array<i32>} : memref<8x8x256xbf16, #tpu.memory_space<vmem>>, vector<8x8x8xbf16>,
    %c0_117 = arith.constant 0 : index
    %c4_118 = arith.constant 4 : index
    %c0_119 = arith.constant 0 : index
    %c0_120 = arith.constant 0 : index
    %63 = vector.load %arg1[%c0_117, %c4_118, %c0_119, %c0_120] : memref<1x12x12x8xbf16, #tpu.memory_space<vmem>>, vector<1x8x8x8xbf16>
    %64 = vector.shape_cast %63 : vector<1x8x8x8xbf16> to vector<8x8x8xbf16>
    %c0_121 = arith.constant 0 : index
    %c0_122 = arith.constant 0 : index
    %c160 = arith.constant 160 : index
    %65 = vector.load %arg4[%c0_121, %c0_122, %c160] : memref<8x8x256xbf16, #tpu.memory_space<vmem>>, vector<8x8x8xbf16>
    tpu.vector_store %arg4[%c0_121, %c0_122, %c160], %64 {strides = array<i32>} : memref<8x8x256xbf16, #tpu.memory_space<vmem>>, vector<8x8x8xbf16>,
    %c0_123 = arith.constant 0 : index
    %c4_124 = arith.constant 4 : index
    %c1_125 = arith.constant 1 : index
    %c0_126 = arith.constant 0 : index
    %66 = vector.load %arg1[%c0_123, %c4_124, %c1_125, %c0_126] : memref<1x12x12x8xbf16, #tpu.memory_space<vmem>>, vector<1x8x8x8xbf16>
    %67 = vector.shape_cast %66 : vector<1x8x8x8xbf16> to vector<8x8x8xbf16>
    %c0_127 = arith.constant 0 : index
    %c0_128 = arith.constant 0 : index
    %c168 = arith.constant 168 : index
    %68 = vector.load %arg4[%c0_127, %c0_128, %c168] : memref<8x8x256xbf16, #tpu.memory_space<vmem>>, vector<8x8x8xbf16>
    tpu.vector_store %arg4[%c0_127, %c0_128, %c168], %67 {strides = array<i32>} : memref<8x8x256xbf16, #tpu.memory_space<vmem>>, vector<8x8x8xbf16>,
    %c0_129 = arith.constant 0 : index
    %c4_130 = arith.constant 4 : index
    %c2_131 = arith.constant 2 : index
    %c0_132 = arith.constant 0 : index
    %69 = vector.load %arg1[%c0_129, %c4_130, %c2_131, %c0_132] : memref<1x12x12x8xbf16, #tpu.memory_space<vmem>>, vector<1x8x8x8xbf16>
    %70 = vector.shape_cast %69 : vector<1x8x8x8xbf16> to vector<8x8x8xbf16>
    %c0_133 = arith.constant 0 : index
    %c0_134 = arith.constant 0 : index
    %c176 = arith.constant 176 : index
    %71 = vector.load %arg4[%c0_133, %c0_134, %c176] : memref<8x8x256xbf16, #tpu.memory_space<vmem>>, vector<8x8x8xbf16>
    tpu.vector_store %arg4[%c0_133, %c0_134, %c176], %70 {strides = array<i32>} : memref<8x8x256xbf16, #tpu.memory_space<vmem>>, vector<8x8x8xbf16>,
    %c0_135 = arith.constant 0 : index
    %c4_136 = arith.constant 4 : index
    %c3_137 = arith.constant 3 : index
    %c0_138 = arith.constant 0 : index
    %72 = vector.load %arg1[%c0_135, %c4_136, %c3_137, %c0_138] : memref<1x12x12x8xbf16, #tpu.memory_space<vmem>>, vector<1x8x8x8xbf16>
    %73 = vector.shape_cast %72 : vector<1x8x8x8xbf16> to vector<8x8x8xbf16>
    %c0_139 = arith.constant 0 : index
    %c0_140 = arith.constant 0 : index
    %c184 = arith.constant 184 : index
    %74 = vector.load %arg4[%c0_139, %c0_140, %c184] : memref<8x8x256xbf16, #tpu.memory_space<vmem>>, vector<8x8x8xbf16>
    tpu.vector_store %arg4[%c0_139, %c0_140, %c184], %73 {strides = array<i32>} : memref<8x8x256xbf16, #tpu.memory_space<vmem>>, vector<8x8x8xbf16>,
    %c0_141 = arith.constant 0 : index
    %c4_142 = arith.constant 4 : index
    %c4_143 = arith.constant 4 : index
    %c0_144 = arith.constant 0 : index
    %75 = vector.load %arg1[%c0_141, %c4_142, %c4_143, %c0_144] : memref<1x12x12x8xbf16, #tpu.memory_space<vmem>>, vector<1x8x8x8xbf16>
    %76 = vector.shape_cast %75 : vector<1x8x8x8xbf16> to vector<8x8x8xbf16>
    %c0_145 = arith.constant 0 : index
    %c0_146 = arith.constant 0 : index
    %c192 = arith.constant 192 : index
    %77 = vector.load %arg4[%c0_145, %c0_146, %c192] : memref<8x8x256xbf16, #tpu.memory_space<vmem>>, vector<8x8x8xbf16>
    tpu.vector_store %arg4[%c0_145, %c0_146, %c192], %76 {strides = array<i32>} : memref<8x8x256xbf16, #tpu.memory_space<vmem>>, vector<8x8x8xbf16>,
    %c0_147 = arith.constant 0 : index
    %c0_148 = arith.constant 0 : index
    %c0_149 = arith.constant 0 : index
    %78 = vector.load %arg4[%c0_147, %c0_148, %c0_149] : memref<8x8x256xbf16, #tpu.memory_space<vmem>>, vector<8x8x256xbf16>
    %79 = vector.shape_cast %78 : vector<8x8x256xbf16> to vector<64x256xbf16>
    %c0_150 = arith.constant 0 : index
    %c0_151 = arith.constant 0 : index
    %80 = vector.load %arg2[%c0_150, %c0_151] : memref<256x128xbf16, #tpu.memory_space<vmem>>, vector<256x128xbf16>
    %cst = arith.constant dense<0.000000e+00> : vector<64x128xf32>
    %81 = tpu.matmul %79, %80, %cst {dimension_numbers = #tpu.dot_dimension_numbers<[1], [0], [0], [1], [0, 0, 1, 1], [], []>} : vector<64x256xbf16>, vector<256x128xbf16>, vector<64x128xf32> -> vector<64x128xf32>
    %c0_152 = arith.constant 0 : index
    %c0_153 = arith.constant 0 : index
    %c0_154 = arith.constant 0 : index
    %82 = vector.load %arg3[%c0_152, %c0_153, %c0_154] : memref<1x64x128xf32, #tpu.memory_space<vmem>>, vector<1x64x128xf32>
    %83 = vector.shape_cast %82 : vector<1x64x128xf32> to vector<64x128xf32>
    %84 = vector.shape_cast %81 : vector<64x128xf32> to vector<1x64x128xf32>
    tpu.vector_store %arg3[%c0_152, %c0_153, %c0_154], %84 {strides = array<i32>} : memref<1x64x128xf32, #tpu.memory_space<vmem>>, vector<1x64x128xf32>,
    return
  }
  func.func @transform_0(%arg0: i32) -> (i32, i32, i32, i32) {
    %c0_i32 = arith.constant 0 : i32
    %c0_i32_0 = arith.constant 0 : i32
    %c0_i32_1 = arith.constant 0 : i32
    %c0_i32_2 = arith.constant 0 : i32
    return %arg0, %c0_i32, %c0_i32_0, %c0_i32_1 : i32, i32, i32, i32
  }
  func.func @transform_1(%arg0: i32) -> (i32, i32) {
    %c0_i32 = arith.constant 0 : i32
    %c0_i32_0 = arith.constant 0 : i32
    %c0_i32_1 = arith.constant 0 : i32
    return %c0_i32, %c0_i32_0 : i32, i32
  }
  func.func @transform_2(%arg0: i32) -> (i32, i32, i32) {
    %c0_i32 = arith.constant 0 : i32
    %c0_i32_0 = arith.constant 0 : i32
    %c0_i32_1 = arith.constant 0 : i32
    return %arg0, %c0_i32, %c0_i32_0 : i32, i32, i32
  }
}

</mosaic_0001>

<llo_original>
// kernel: tpu_custom_call.1
$region0: #{tpu_custom_call.1}
  #allocation0 [shape = 'u32[]', space=smem, size = 0x4, offset = 0x4, fixed_abs, tag = 'smem constant byte address 0x4 - core index']
  #allocation1 [shape = 'u32[72,128]{1,0:T(1,128)}', space=vmem, size = 0x9000, scoped, tag = 'internal scratch']
  #allocation2 [shape = 'bf16[8,8,256]{2,1,0:T(8,128)(2,1)}', space=vmem, size = 0x8000, scoped, tag = 'scratch operand']
  %s0 = inlined_call_operand.vmem [shape: bf16[2,12,12,8], index: 0, kind: input, shape index: {}]
  %s1 = inlined_call_operand.vmem [shape: bf16[256,128], index: 1, kind: input, shape index: {}]
  %s2 = inlined_call_operand.hbm [shape: f32[2,64,128], index: 2, kind: output, shape index: {}]
  %s3 = sld [smem:[#allocation0]]
  $region45: #{tpu_custom_call.1} parent=0
    _
  %s5 = ssub.s32 1, %s3
  %s6 = scalar_select 0, %s5, %s3
  $region1: #{tpu_custom_call.1} parent=0
    #allocation3 [shape = 'u8[65536]{0}', space=vmem, size = 0x10000, scoped, tag = 'output window, operand 0']
    #allocation4 [shape = 's32[2]{0}', space=sflag, size = 0x8, scoped, tag = 'scoped memory for tpu_custom_call.1']
    %7 = vsyncpa [#allocation4], 0
    %s8 = scalar_lea.sflag [#allocation4], 1
    %9 = vsyncpa %s8, 0
    loop: start=0, step=1, limit=4
    $region2: #{tpu_custom_call.1} parent=1 // loop_pre_header
      _
    $region3: #{tpu_custom_call.1} parent=1 // loop_header
      %s11 = sphi 0, %s15
      %p12 = scmp.ge.s32.totalorder %s11, 4
      %s21 = sphi 0, %s23
      %s24 = sphi 0, %s21
      %s25 = sphi 0, %s24
      %s41 = sphi 0, %s25
      %s45 = sphi 0, %s45
      %s47 = sphi 0, %s45
      %s48 = sphi 0, %s47
      %s62 = sphi 0, %s48
      %s68 = sphi 0, %s70
      %s71 = sphi 0, %s68
      %s72 = sphi 0, %s71
      %s88 = sphi 0, %s72
    $region4: #{tpu_custom_call.1} parent=1 // loop_header_branch
      %14 = sbr.rel (%p12) target = $region8
    $region5: #{tpu_custom_call.1} parent=1 // loop_body
      %s16 = ssub.s32 %s11, 1
      %s17 = ssub.s32 %s11, 2
      %s18 = sadd.s32 %s11, 1
      %s19 = ssub.s32 %s11, %s18
      %p20 = scmp.eq.s32.totalorder %s19, 0
      %s22 = sadd.s32 %s21, 1
      %s23 = scalar_select %p20, %s21, %s22
      %p26 = pneg %p20
      %p27 = scmp.eq.s32.totalorder %s11, 1
      %p28 = por %p26, %p27
      %p29 = scmp.ne.s32.totalorder %s21, %s24
      %p30 = scmp.eq.s32.totalorder %s11, 0
      %p31 = por %p29, %p30
      %p32 = scmp.ne.s32.totalorder %s21, %s24
      %p33 = scmp.eq.s32.totalorder %s16, 1
      %p34 = por %p32, %p33
      %p35 = scmp.ne.s32.totalorder %s24, %s25
      %p36 = scmp.eq.s32.totalorder %s16, 0
      %p37 = por %p35, %p36
      %p38 = scmp.ne.s32.totalorder %s24, %s25
      %p39 = scmp.eq.s32.totalorder %s17, 1
      %p40 = por %p38, %p39
      %p42 = scmp.ne.s32.totalorder %s25, %s41
      %p43 = scmp.eq.s32.totalorder %s17, 0
      %p44 = por %p42, %p43
      %s46 = sadd.s32 %s45, 1
      %p49 = scmp.eq.s32.totalorder %s11, 1
      %p50 = scmp.ne.s32.totalorder %s45, %s47
      %p51 = scmp.eq.s32.totalorder %s11, 0
      %p52 = por %p50, %p51
      %p53 = scmp.ne.s32.totalorder %s45, %s47
      %p54 = scmp.eq.s32.totalorder %s16, 1
      %p55 = por %p53, %p54
      %p56 = scmp.ne.s32.totalorder %s47, %s48
      %p57 = scmp.eq.s32.totalorder %s16, 0
      %p58 = por %p56, %p57
      %p59 = scmp.ne.s32.totalorder %s47, %s48
      %p60 = scmp.eq.s32.totalorder %s17, 1
      %p61 = por %p59, %p60
      %p63 = scmp.ne.s32.totalorder %s48, %s62
      %p64 = scmp.eq.s32.totalorder %s17, 0
      %p65 = por %p63, %p64
      %s66 = ssub.s32 %s11, %s18
      %p67 = scmp.eq.s32.totalorder %s66, 0
      %s69 = sadd.s32 %s68, 1
      %s70 = scalar_select %p67, %s68, %s69
      %p73 = pneg %p67
      %p74 = scmp.eq.s32.totalorder %s11, 1
      %p75 = por %p73, %p74
      %p76 = scmp.ne.s32.totalorder %s68, %s71
      %p77 = scmp.eq.s32.totalorder %s11, 0
      %p78 = por %p76, %p77
      %p79 = scmp.ne.s32.totalorder %s68, %s71
      %p80 = scmp.eq.s32.totalorder %s16, 1
      %p81 = por %p79, %p80
      %p82 = scmp.ne.s32.totalorder %s71, %s72
      %p83 = scmp.eq.s32.totalorder %s16, 0
      %p84 = por %p82, %p83
      %p85 = scmp.ne.s32.totalorder %s71, %s72
      %p86 = scmp.eq.s32.totalorder %s17, 1
      %p87 = por %p85, %p86
      %p89 = scmp.ne.s32.totalorder %s72, %s88
      %p90 = scmp.eq.s32.totalorder %s17, 0
      %p91 = por %p89, %p90
      %p92 = scmp.le.s32.totalorder 1, %s11
      %p93 = scmp.lt.s32.totalorder %s11, 3
      %p94 = pnand %p92, %p93
      %p95 = pneg %p94
      // Predicated region
      $region9: #{tpu_custom_call.1} parent=5 // pred_check
        _
      $region10: #{tpu_custom_call.1} parent=5 // pred_check_branch
        %97 = sbr.rel (%p94) target = $region12
      $region11: #{tpu_custom_call.1} parent=5 // pred_region
        %s98 = ssub.s32 %s11, 1
        // Predicated region
        $region13: #{tpu_custom_call.1} parent=11 // pred_check
          %p99 = pneg %p58
        $region14: #{tpu_custom_call.1} parent=11 // pred_check_branch
          %101 = sbr.rel (%p99) target = $region16
        $region15: #{tpu_custom_call.1} parent=11 // pred_region
          _
        $region16: #{tpu_custom_call.1} parent=11 // pred_fallthru
          _
      $region12: #{tpu_custom_call.1} parent=5 // pred_fallthru
        _
      %p102 = scmp.lt.s32.totalorder %s11, 2
      // Predicated region
      $region17: #{tpu_custom_call.1} parent=5 // pred_check
        %p103 = pneg %p102
      $region18: #{tpu_custom_call.1} parent=5 // pred_check_branch
        %105 = sbr.rel (%p103) target = $region20
      $region19: #{tpu_custom_call.1} parent=5 // pred_region
        // Predicated region
        $region21: #{tpu_custom_call.1} parent=19 // pred_check
          %p106 = pneg %p31
        $region22: #{tpu_custom_call.1} parent=19 // pred_check_branch
          %108 = sbr.rel (%p106) target = $region24
        $region23: #{tpu_custom_call.1} parent=19 // pred_region
          %p109 = scmp.lt.s32.totalorder %s11, 1
          %s110 = scalar_select %p109, %s11, 1
          %s111 = smul.addr %s110, 24
          %s112 = smul.addr %s111, 4
          %s113 = scalar_lea.vmem %s0, %s112
        $region24: #{tpu_custom_call.1} parent=19 // pred_fallthru
          _
      $region20: #{tpu_custom_call.1} parent=5 // pred_fallthru
        _
      %p114 = scmp.le.s32.totalorder 1, %s11
      %p115 = scmp.lt.s32.totalorder %s11, 3
      %p116 = pnand %p114, %p115
      %p117 = pneg %p116
      // Predicated region
      $region25: #{tpu_custom_call.1} parent=5 // pred_check
        _
      $region26: #{tpu_custom_call.1} parent=5 // pred_check_branch
        %119 = sbr.rel (%p116) target = $region28
      $region27: #{tpu_custom_call.1} parent=5 // pred_region
        %s120 = ssub.s32 %s11, 1
        %p121 = scmp.lt.s32.totalorder %s16, 1
        %s122 = scalar_select %p121, %s16, 1
        %s123 = smul.addr %s122, 24
        %s124 = smul.addr %s123, 4
        %s125 = scalar_lea.vmem %s0, %s124
        %p126 = pneg %p37
        %p127 = pneg %p34
        %p128 = pneg %p58
        %p129 = pneg %p55
        %p130 = pneg %p84
        %p131 = pneg %p81
        %s132 = sand.u32 %s71, 1
        %s133 = scalar_lea.sflag [#allocation4], %s132
        %s134 = sand.u32 %s71, 1
        %s135 = smul.addr %s134, 64
        %s136 = scalar_lea.vmem [#allocation3], %s135
        %p137 = scmp.lt.s32.totalorder %s16, 1
        %s138 = scalar_select %p137, %s16, 1
        %s139 = smul.addr %s138, 24
        %s140 = smul.addr %s139, 4
        %s141 = scalar_lea.vmem %s0, %s140
        %p143 = scmp.eq.s32.totalorder %s16, 0
        // Predicated region
        $region29: #{tpu_custom_call.1} parent=27 // pred_check
          %p144 = pneg %p143
        $region30: #{tpu_custom_call.1} parent=27 // pred_check_branch
          %146 = sbr.rel (%p144) target = $region32
        $region31: #{tpu_custom_call.1} parent=27 // pred_region
          %147 = vst [vmem:[#allocation2] sm:$0xff] 0
          %148 = vst [vmem:[#allocation2 + $0x8] sm:$0xff] 0
          %149 = vst [vmem:[#allocation2 + $0x10] sm:$0xff] 0
          %150 = vst [vmem:[#allocation2 + $0x18] sm:$0xff] 0
          %151 = vst [vmem:[#allocation2 + $0x20] sm:$0xff] 0
          %152 = vst [vmem:[#allocation2 + $0x28] sm:$0xff] 0
          %153 = vst [vmem:[#allocation2 + $0x30] sm:$0xff] 0
          %154 = vst [vmem:[#allocation2 + $0x38] sm:$0xff] 0
        $region32: #{tpu_custom_call.1} parent=27 // pred_fallthru
          _
        %v155 = vld [vmem:[%s141] sm:$0xf]
        %v156 = vld [vmem:[%s141 + $0x8] sm:$0xf]
        %v157 = vld [vmem:[%s141 + $0x10] sm:$0xf]
        %v158 = vld [vmem:[%s141 + $0x18] sm:$0xf]
        %v159 = vld [vmem:[%s141 + $0x20] sm:$0xf]
        %v160 = vld [vmem:[%s141 + $0x28] sm:$0xf]
        %v161 = vld [vmem:[%s141 + $0x30] sm:$0xf]
        %v162 = vld [vmem:[%s141 + $0x38] sm:$0xf]
        %vm163 = vcmask 60416
        %164 = vst.msk [vmem:[#allocation2] sm:$0xf] %vm163, %v155
        %165 = vst.msk [vmem:[#allocation2 + $0x8] sm:$0xf] %vm163, %v156
        %166 = vst.msk [vmem:[#allocation2 + $0x10] sm:$0xf] %vm163, %v157
        %167 = vst.msk [vmem:[#allocation2 + $0x18] sm:$0xf] %vm163, %v158
        %168 = vst.msk [vmem:[#allocation2 + $0x20] sm:$0xf] %vm163, %v159
        %169 = vst.msk [vmem:[#allocation2 + $0x28] sm:$0xf] %vm163, %v160
        %170 = vst.msk [vmem:[#allocation2 + $0x30] sm:$0xf] %vm163, %v161
        %171 = vst.msk [vmem:[#allocation2 + $0x38] sm:$0xf] %vm163, %v162
        %v172 = vld [vmem:[%s141] sm:$0xf]
        %v173 = vld [vmem:[%s141 + $0x4] sm:$0x1]
        %v174 = vld [vmem:[%s141 + $0x8] sm:$0xf]
        %v175 = vld [vmem:[%s141 + $0xc] sm:$0x1]
        %v176 = vld [vmem:[%s141 + $0x10] sm:$0xf]
        %v177 = vld [vmem:[%s141 + $0x14] sm:$0x1]
        %v178 = vld [vmem:[%s141 + $0x18] sm:$0xf]
        %v179 = vld [vmem:[%s141 + $0x1c] sm:$0x1]
        %v180 = vld [vmem:[%s141 + $0x20] sm:$0xf]
        %v181 = vld [vmem:[%s141 + $0x24] sm:$0x1]
        %v182 = vld [vmem:[%s141 + $0x28] sm:$0xf]
        %v183 = vld [vmem:[%s141 + $0x2c] sm:$0x1]
        %v184 = vld [vmem:[%s141 + $0x30] sm:$0xf]
        %v185 = vld [vmem:[%s141 + $0x34] sm:$0x1]
        %v186 = vld [vmem:[%s141 + $0x38] sm:$0xf]
        %v187 = vld [vmem:[%s141 + $0x3c] sm:$0x1]
        %vm188 = vsmask.f32 3328
        %vm189 = vsmask.f32 7440
        %vm190 = vmor %vm188, %vm189
        %v192 = vshrl.u32 %v172, 16
        %v194 = vrot.slane %v192, 4
        %v195 = vshll.u32 %v172, 16
        %v197 = vrot.slane %v195, 5
        %v198 = vor.u32 %v194, %v197
        %v199 = vrot.slane %v198, 4
        %v201 = vshll.u32 %v173, 16
        %v203 = vrot.slane %v201, 5
        %v204 = vsel %vm190, %v199, %v203
        %v206 = vshrl.u32 %v174, 16
        %v208 = vrot.slane %v206, 4
        %v209 = vshll.u32 %v174, 16
        %v211 = vrot.slane %v209, 5
        %v212 = vor.u32 %v208, %v211
        %v213 = vrot.slane %v212, 4
        %v215 = vshll.u32 %v175, 16
        %v217 = vrot.slane %v215, 5
        %v218 = vsel %vm190, %v213, %v217
        %v220 = vshrl.u32 %v176, 16
        %v222 = vrot.slane %v220, 4
        %v223 = vshll.u32 %v176, 16
        %v225 = vrot.slane %v223, 5
        %v226 = vor.u32 %v222, %v225
        %v227 = vrot.slane %v226, 4
        %v229 = vshll.u32 %v177, 16
        %v231 = vrot.slane %v229, 5
        %v232 = vsel %vm190, %v227, %v231
        %v234 = vshrl.u32 %v178, 16
        %v236 = vrot.slane %v234, 4
        %v237 = vshll.u32 %v178, 16
        %v239 = vrot.slane %v237, 5
        %v240 = vor.u32 %v236, %v239
        %v241 = vrot.slane %v240, 4
        %v243 = vshll.u32 %v179, 16
        %v245 = vrot.slane %v243, 5
        %v246 = vsel %vm190, %v241, %v245
        %v248 = vshrl.u32 %v180, 16
        %v250 = vrot.slane %v248, 4
        %v251 = vshll.u32 %v180, 16
        %v253 = vrot.slane %v251, 5
        %v254 = vor.u32 %v250, %v253
        %v255 = vrot.slane %v254, 4
        %v257 = vshll.u32 %v181, 16
        %v259 = vrot.slane %v257, 5
        %v260 = vsel %vm190, %v255, %v259
        %v262 = vshrl.u32 %v182, 16
        %v264 = vrot.slane %v262, 4
        %v265 = vshll.u32 %v182, 16
        %v267 = vrot.slane %v265, 5
        %v268 = vor.u32 %v264, %v267
        %v269 = vrot.slane %v268, 4
        %v271 = vshll.u32 %v183, 16
        %v273 = vrot.slane %v271, 5
        %v274 = vsel %vm190, %v269, %v273
        %v276 = vshrl.u32 %v184, 16
        %v278 = vrot.slane %v276, 4
        %v279 = vshll.u32 %v184, 16
        %v281 = vrot.slane %v279, 5
        %v282 = vor.u32 %v278, %v281
        %v283 = vrot.slane %v282, 4
        %v285 = vshll.u32 %v185, 16
        %v287 = vrot.slane %v285, 5
        %v288 = vsel %vm190, %v283, %v287
        %v290 = vshrl.u32 %v186, 16
        %v292 = vrot.slane %v290, 4
        %v293 = vshll.u32 %v186, 16
        %v295 = vrot.slane %v293, 5
        %v296 = vor.u32 %v292, %v295
        %v297 = vrot.slane %v296, 4
        %v299 = vshll.u32 %v187, 16
        %v301 = vrot.slane %v299, 5
        %v302 = vsel %vm190, %v297, %v301
        %303 = vrot.lane.b32.xlu0 %v204, 8
        %v304 = vpop.permute.xlu0 %303
        %305 = vrot.lane.b32.xlu0 %v218, 8
        %v306 = vpop.permute.xlu0 %305
        %307 = vrot.lane.b32.xlu0 %v232, 8
        %v308 = vpop.permute.xlu0 %307
        %309 = vrot.lane.b32.xlu0 %v246, 8
        %v310 = vpop.permute.xlu0 %309
        %311 = vrot.lane.b32.xlu0 %v260, 8
        %v312 = vpop.permute.xlu0 %311
        %313 = vrot.lane.b32.xlu0 %v274, 8
        %v314 = vpop.permute.xlu0 %313
        %315 = vrot.lane.b32.xlu0 %v288, 8
        %v316 = vpop.permute.xlu0 %315
        %317 = vrot.lane.b32.xlu0 %v302, 8
        %v318 = vpop.permute.xlu0 %317
        %vm327 = vcmask 126016
        %328 = vst.msk [vmem:[#allocation2] sm:$0xf] %vm327, %v304
        %329 = vst.msk [vmem:[#allocation2 + $0x8] sm:$0xf] %vm327, %v306
        %330 = vst.msk [vmem:[#allocation2 + $0x10] sm:$0xf] %vm327, %v308
        %331 = vst.msk [vmem:[#allocation2 + $0x18] sm:$0xf] %vm327, %v310
        %332 = vst.msk [vmem:[#allocation2 + $0x20] sm:$0xf] %vm327, %v312
        %333 = vst.msk [vmem:[#allocation2 + $0x28] sm:$0xf] %vm327, %v314
        %334 = vst.msk [vmem:[#allocation2 + $0x30] sm:$0xf] %vm327, %v316
        %335 = vst.msk [vmem:[#allocation2 + $0x38] sm:$0xf] %vm327, %v318
        %v336 = vld [vmem:[%s141] sm:$0xe]
        %v337 = vld [vmem:[%s141 + $0x4] sm:$0x1]
        %v338 = vld [vmem:[%s141 + $0x8] sm:$0xe]
        %v339 = vld [vmem:[%s141 + $0xc] sm:$0x1]
        %v340 = vld [vmem:[%s141 + $0x10] sm:$0xe]
        %v341 = vld [vmem:[%s141 + $0x14] sm:$0x1]
        %v342 = vld [vmem:[%s141 + $0x18] sm:$0xe]
        %v343 = vld [vmem:[%s141 + $0x1c] sm:$0x1]
        %v344 = vld [vmem:[%s141 + $0x20] sm:$0xe]
        %v345 = vld [vmem:[%s141 + $0x24] sm:$0x1]
        %v346 = vld [vmem:[%s141 + $0x28] sm:$0xe]
        %v347 = vld [vmem:[%s141 + $0x2c] sm:$0x1]
        %v348 = vld [vmem:[%s141 + $0x30] sm:$0xe]
        %v349 = vld [vmem:[%s141 + $0x34] sm:$0x1]
        %v350 = vld [vmem:[%s141 + $0x38] sm:$0xe]
        %v351 = vld [vmem:[%s141 + $0x3c] sm:$0x1]
        %vm368 = vcmask 1042432
        %vm369 = vcmask 1046532
        %vm370 = vmor %vm368, %vm369
        %v371 = vrot.slane %v336, 5
        %v372 = vrot.slane %v371, 4
        %v373 = vrot.slane %v337, 5
        %v374 = vsel %vm370, %v372, %v373
        %v375 = vrot.slane %v338, 5
        %v376 = vrot.slane %v375, 4
        %v377 = vrot.slane %v339, 5
        %v378 = vsel %vm370, %v376, %v377
        %v379 = vrot.slane %v340, 5
        %v380 = vrot.slane %v379, 4
        %v381 = vrot.slane %v341, 5
        %v382 = vsel %vm370, %v380, %v381
        %v383 = vrot.slane %v342, 5
        %v384 = vrot.slane %v383, 4
        %v385 = vrot.slane %v343, 5
        %v386 = vsel %vm370, %v384, %v385
        %v387 = vrot.slane %v344, 5
        %v388 = vrot.slane %v387, 4
        %v389 = vrot.slane %v345, 5
        %v390 = vsel %vm370, %v388, %v389
        %v391 = vrot.slane %v346, 5
        %v392 = vrot.slane %v391, 4
        %v393 = vrot.slane %v347, 5
        %v394 = vsel %vm370, %v392, %v393
        %v395 = vrot.slane %v348, 5
        %v396 = vrot.slane %v395, 4
        %v397 = vrot.slane %v349, 5
        %v398 = vsel %vm370, %v396, %v397
        %v399 = vrot.slane %v350, 5
        %v400 = vrot.slane %v399, 4
        %v401 = vrot.slane %v351, 5
        %v402 = vsel %vm370, %v400, %v401
        %403 = vrot.lane.b32.xlu0 %v374, 16
        %v404 = vpop.permute.xlu0 %403
        %405 = vrot.lane.b32.xlu0 %v378, 16
        %v406 = vpop.permute.xlu0 %405
        %407 = vrot.lane.b32.xlu0 %v382, 16
        %v408 = vpop.permute.xlu0 %407
        %409 = vrot.lane.b32.xlu0 %v386, 16
        %v410 = vpop.permute.xlu0 %409
        %411 = vrot.lane.b32.xlu0 %v390, 16
        %v412 = vpop.permute.xlu0 %411
        %413 = vrot.lane.b32.xlu0 %v394, 16
        %v414 = vpop.permute.xlu0 %413
        %415 = vrot.lane.b32.xlu0 %v398, 16
        %v416 = vpop.permute.xlu0 %415
        %417 = vrot.lane.b32.xlu0 %v402, 16
        %v418 = vpop.permute.xlu0 %417
        %vm427 = vcmask 191616
        %428 = vst.msk [vmem:[#allocation2] sm:$0xf] %vm427, %v404
        %429 = vst.msk [vmem:[#allocation2 + $0x8] sm:$0xf] %vm427, %v406
        %430 = vst.msk [vmem:[#allocation2 + $0x10] sm:$0xf] %vm427, %v408
        %431 = vst.msk [vmem:[#allocation2 + $0x18] sm:$0xf] %vm427, %v410
        %432 = vst.msk [vmem:[#allocation2 + $0x20] sm:$0xf] %vm427, %v412
        %433 = vst.msk [vmem:[#allocation2 + $0x28] sm:$0xf] %vm427, %v414
        %434 = vst.msk [vmem:[#allocation2 + $0x30] sm:$0xf] %vm427, %v416
        %435 = vst.msk [vmem:[#allocation2 + $0x38] sm:$0xf] %vm427, %v418
        %v436 = vld [vmem:[%s141] sm:$0xe]
        %v437 = vld [vmem:[%s141 + $0x4] sm:$0x3]
        %v438 = vld [vmem:[%s141 + $0x8] sm:$0xe]
        %v439 = vld [vmem:[%s141 + $0xc] sm:$0x3]
        %v440 = vld [vmem:[%s141 + $0x10] sm:$0xe]
        %v441 = vld [vmem:[%s141 + $0x14] sm:$0x3]
        %v442 = vld [vmem:[%s141 + $0x18] sm:$0xe]
        %v443 = vld [vmem:[%s141 + $0x1c] sm:$0x3]
        %v444 = vld [vmem:[%s141 + $0x20] sm:$0xe]
        %v445 = vld [vmem:[%s141 + $0x24] sm:$0x3]
        %v446 = vld [vmem:[%s141 + $0x28] sm:$0xe]
        %v447 = vld [vmem:[%s141 + $0x2c] sm:$0x3]
        %v448 = vld [vmem:[%s141 + $0x30] sm:$0xe]
        %v449 = vld [vmem:[%s141 + $0x34] sm:$0x3]
        %v450 = vld [vmem:[%s141 + $0x38] sm:$0xe]
        %v451 = vld [vmem:[%s141 + $0x3c] sm:$0x3]
        %vm452 = vsmask.f32 2304
        %vm453 = vsmask.f32 6416
        %vm454 = vmor %vm452, %vm453
        %v456 = vshrl.u32 %v436, 16
        %v458 = vrot.slane %v456, 5
        %v459 = vshll.u32 %v436, 16
        %v461 = vrot.slane %v459, 6
        %v462 = vor.u32 %v458, %v461
        %v463 = vrot.slane %v462, 4
        %v465 = vshrl.u32 %v437, 16
        %v467 = vrot.slane %v465, 5
        %v468 = vshll.u32 %v437, 16
        %v470 = vrot.slane %v468, 6
        %v471 = vor.u32 %v467, %v470
        %v472 = vsel %vm454, %v463, %v471
        %v474 = vshrl.u32 %v438, 16
        %v476 = vrot.slane %v474, 5
        %v477 = vshll.u32 %v438, 16
        %v479 = vrot.slane %v477, 6
        %v480 = vor.u32 %v476, %v479
        %v481 = vrot.slane %v480, 4
        %v483 = vshrl.u32 %v439, 16
        %v485 = vrot.slane %v483, 5
        %v486 = vshll.u32 %v439, 16
        %v488 = vrot.slane %v486, 6
        %v489 = vor.u32 %v485, %v488
        %v490 = vsel %vm454, %v481, %v489
        %v492 = vshrl.u32 %v440, 16
        %v494 = vrot.slane %v492, 5
        %v495 = vshll.u32 %v440, 16
        %v497 = vrot.slane %v495, 6
        %v498 = vor.u32 %v494, %v497
        %v499 = vrot.slane %v498, 4
        %v501 = vshrl.u32 %v441, 16
        %v503 = vrot.slane %v501, 5
        %v504 = vshll.u32 %v441, 16
        %v506 = vrot.slane %v504, 6
        %v507 = vor.u32 %v503, %v506
        %v508 = vsel %vm454, %v499, %v507
        %v510 = vshrl.u32 %v442, 16
        %v512 = vrot.slane %v510, 5
        %v513 = vshll.u32 %v442, 16
        %v515 = vrot.slane %v513, 6
        %v516 = vor.u32 %v512, %v515
        %v517 = vrot.slane %v516, 4
        %v519 = vshrl.u32 %v443, 16
        %v521 = vrot.slane %v519, 5
        %v522 = vshll.u32 %v443, 16
        %v524 = vrot.slane %v522, 6
        %v525 = vor.u32 %v521, %v524
        %v526 = vsel %vm454, %v517, %v525
        %v528 = vshrl.u32 %v444, 16
        %v530 = vrot.slane %v528, 5
        %v531 = vshll.u32 %v444, 16
        %v533 = vrot.slane %v531, 6
        %v534 = vor.u32 %v530, %v533
        %v535 = vrot.slane %v534, 4
        %v537 = vshrl.u32 %v445, 16
        %v539 = vrot.slane %v537, 5
        %v540 = vshll.u32 %v445, 16
        %v542 = vrot.slane %v540, 6
        %v543 = vor.u32 %v539, %v542
        %v544 = vsel %vm454, %v535, %v543
        %v546 = vshrl.u32 %v446, 16
        %v548 = vrot.slane %v546, 5
        %v549 = vshll.u32 %v446, 16
        %v551 = vrot.slane %v549, 6
        %v552 = vor.u32 %v548, %v551
        %v553 = vrot.slane %v552, 4
        %v555 = vshrl.u32 %v447, 16
        %v557 = vrot.slane %v555, 5
        %v558 = vshll.u32 %v447, 16
        %v560 = vrot.slane %v558, 6
        %v561 = vor.u32 %v557, %v560
        %v562 = vsel %vm454, %v553, %v561
        %v564 = vshrl.u32 %v448, 16
        %v566 = vrot.slane %v564, 5
        %v567 = vshll.u32 %v448, 16
        %v569 = vrot.slane %v567, 6
        %v570 = vor.u32 %v566, %v569
        %v571 = vrot.slane %v570, 4
        %v573 = vshrl.u32 %v449, 16
        %v575 = vrot.slane %v573, 5
        %v576 = vshll.u32 %v449, 16
        %v578 = vrot.slane %v576, 6
        %v579 = vor.u32 %v575, %v578
        %v580 = vsel %vm454, %v571, %v579
        %v582 = vshrl.u32 %v450, 16
        %v584 = vrot.slane %v582, 5
        %v585 = vshll.u32 %v450, 16
        %v587 = vrot.slane %v585, 6
        %v588 = vor.u32 %v584, %v587
        %v589 = vrot.slane %v588, 4
        %v591 = vshrl.u32 %v451, 16
        %v593 = vrot.slane %v591, 5
        %v594 = vshll.u32 %v451, 16
        %v596 = vrot.slane %v594, 6
        %v597 = vor.u32 %v593, %v596
        %v598 = vsel %vm454, %v589, %v597
        %599 = vrot.lane.b32.xlu0 %v472, 24
        %v600 = vpop.permute.xlu0 %599
        %601 = vrot.lane.b32.xlu0 %v490, 24
        %v602 = vpop.permute.xlu0 %601
        %603 = vrot.lane.b32.xlu0 %v508, 24
        %v604 = vpop.permute.xlu0 %603
        %605 = vrot.lane.b32.xlu0 %v526, 24
        %v606 = vpop.permute.xlu0 %605
        %607 = vrot.lane.b32.xlu0 %v544, 24
        %v608 = vpop.permute.xlu0 %607
        %609 = vrot.lane.b32.xlu0 %v562, 24
        %v610 = vpop.permute.xlu0 %609
        %611 = vrot.lane.b32.xlu0 %v580, 24
        %v612 = vpop.permute.xlu0 %611
        %613 = vrot.lane.b32.xlu0 %v598, 24
        %v614 = vpop.permute.xlu0 %613
        %vm623 = vcmask 257216
        %624 = vst.msk [vmem:[#allocation2] sm:$0xf] %vm623, %v600
        %625 = vst.msk [vmem:[#allocation2 + $0x8] sm:$0xf] %vm623, %v602
        %626 = vst.msk [vmem:[#allocation2 + $0x10] sm:$0xf] %vm623, %v604
        %627 = vst.msk [vmem:[#allocation2 + $0x18] sm:$0xf] %vm623, %v606
        %628 = vst.msk [vmem:[#allocation2 + $0x20] sm:$0xf] %vm623, %v608
        %629 = vst.msk [vmem:[#allocation2 + $0x28] sm:$0xf] %vm623, %v610
        %630 = vst.msk [vmem:[#allocation2 + $0x30] sm:$0xf] %vm623, %v612
        %631 = vst.msk [vmem:[#allocation2 + $0x38] sm:$0xf] %vm623, %v614
        %v632 = vld [vmem:[%s141] sm:$0xc]
        %v633 = vld [vmem:[%s141 + $0x4] sm:$0x3]
        %v634 = vld [vmem:[%s141 + $0x8] sm:$0xc]
        %v635 = vld [vmem:[%s141 + $0xc] sm:$0x3]
        %v636 = vld [vmem:[%s141 + $0x10] sm:$0xc]
        %v637 = vld [vmem:[%s141 + $0x14] sm:$0x3]
        %v638 = vld [vmem:[%s141 + $0x18] sm:$0xc]
        %v639 = vld [vmem:[%s141 + $0x1c] sm:$0x3]
        %v640 = vld [vmem:[%s141 + $0x20] sm:$0xc]
        %v641 = vld [vmem:[%s141 + $0x24] sm:$0x3]
        %v642 = vld [vmem:[%s141 + $0x28] sm:$0xc]
        %v643 = vld [vmem:[%s141 + $0x2c] sm:$0x3]
        %v644 = vld [vmem:[%s141 + $0x30] sm:$0xc]
        %v645 = vld [vmem:[%s141 + $0x34] sm:$0x3]
        %v646 = vld [vmem:[%s141 + $0x38] sm:$0xc]
        %v647 = vld [vmem:[%s141 + $0x3c] sm:$0x3]
        %vm664 = vcmask 1041408
        %vm665 = vcmask 1045508
        %vm666 = vmor %vm664, %vm665
        %v667 = vrot.slane %v632, 6
        %v668 = vrot.slane %v667, 4
        %v669 = vrot.slane %v633, 6
        %v670 = vsel %vm666, %v668, %v669
        %v671 = vrot.slane %v634, 6
        %v672 = vrot.slane %v671, 4
        %v673 = vrot.slane %v635, 6
        %v674 = vsel %vm666, %v672, %v673
        %v675 = vrot.slane %v636, 6
        %v676 = vrot.slane %v675, 4
        %v677 = vrot.slane %v637, 6
        %v678 = vsel %vm666, %v676, %v677
        %v679 = vrot.slane %v638, 6
        %v680 = vrot.slane %v679, 4
        %v681 = vrot.slane %v639, 6
        %v682 = vsel %vm666, %v680, %v681
        %v683 = vrot.slane %v640, 6
        %v684 = vrot.slane %v683, 4
        %v685 = vrot.slane %v641, 6
        %v686 = vsel %vm666, %v684, %v685
        %v687 = vrot.slane %v642, 6
        %v688 = vrot.slane %v687, 4
        %v689 = vrot.slane %v643, 6
        %v690 = vsel %vm666, %v688, %v689
        %v691 = vrot.slane %v644, 6
        %v692 = vrot.slane %v691, 4
        %v693 = vrot.slane %v645, 6
        %v694 = vsel %vm666, %v692, %v693
        %v695 = vrot.slane %v646, 6
        %v696 = vrot.slane %v695, 4
        %v697 = vrot.slane %v647, 6
        %v698 = vsel %vm666, %v696, %v697
        %699 = vrot.lane.b32.xlu0 %v670, 32
        %v700 = vpop.permute.xlu0 %699
        %701 = vrot.lane.b32.xlu0 %v674, 32
        %v702 = vpop.permute.xlu0 %701
        %703 = vrot.lane.b32.xlu0 %v678, 32
        %v704 = vpop.permute.xlu0 %703
        %705 = vrot.lane.b32.xlu0 %v682, 32
        %v706 = vpop.permute.xlu0 %705
        %707 = vrot.lane.b32.xlu0 %v686, 32
        %v708 = vpop.permute.xlu0 %707
        %709 = vrot.lane.b32.xlu0 %v690, 32
        %v710 = vpop.permute.xlu0 %709
        %711 = vrot.lane.b32.xlu0 %v694, 32
        %v712 = vpop.permute.xlu0 %711
        %713 = vrot.lane.b32.xlu0 %v698, 32
        %v714 = vpop.permute.xlu0 %713
        %vm723 = vcmask 322816
        %724 = vst.msk [vmem:[#allocation2] sm:$0xf] %vm723, %v700
        %725 = vst.msk [vmem:[#allocation2 + $0x8] sm:$0xf] %vm723, %v702
        %726 = vst.msk [vmem:[#allocation2 + $0x10] sm:$0xf] %vm723, %v704
        %727 = vst.msk [vmem:[#allocation2 + $0x18] sm:$0xf] %vm723, %v706
        %728 = vst.msk [vmem:[#allocation2 + $0x20] sm:$0xf] %vm723, %v708
        %729 = vst.msk [vmem:[#allocation2 + $0x28] sm:$0xf] %vm723, %v710
        %730 = vst.msk [vmem:[#allocation2 + $0x30] sm:$0xf] %vm723, %v712
        %731 = vst.msk [vmem:[#allocation2 + $0x38] sm:$0xf] %vm723, %v714
        %s732 = scalar_lea.vmem %s141, 8
        %v733 = vld [vmem:[%s732] sm:$0xf]
        %v734 = vld [vmem:[%s732 + $0x8] sm:$0xf]
        %v735 = vld [vmem:[%s732 + $0x10] sm:$0xf]
        %v736 = vld [vmem:[%s732 + $0x18] sm:$0xf]
        %v737 = vld [vmem:[%s732 + $0x20] sm:$0xf]
        %v738 = vld [vmem:[%s732 + $0x28] sm:$0xf]
        %v739 = vld [vmem:[%s732 + $0x30] sm:$0xf]
        %v740 = vld [vmem:[%s732 + $0x38] sm:$0xf]
        %749 = vrot.lane.b32.xlu0 %v733, 40
        %v750 = vpop.permute.xlu0 %749
        %751 = vrot.lane.b32.xlu0 %v734, 40
        %v752 = vpop.permute.xlu0 %751
        %753 = vrot.lane.b32.xlu0 %v735, 40
        %v754 = vpop.permute.xlu0 %753
        %755 = vrot.lane.b32.xlu0 %v736, 40
        %v756 = vpop.permute.xlu0 %755
        %757 = vrot.lane.b32.xlu0 %v737, 40
        %v758 = vpop.permute.xlu0 %757
        %759 = vrot.lane.b32.xlu0 %v738, 40
        %v760 = vpop.permute.xlu0 %759
        %761 = vrot.lane.b32.xlu0 %v739, 40
        %v762 = vpop.permute.xlu0 %761
        %763 = vrot.lane.b32.xlu0 %v740, 40
        %v764 = vpop.permute.xlu0 %763
        %vm773 = vcmask 388416
        %774 = vst.msk [vmem:[#allocation2] sm:$0xf] %vm773, %v750
        %775 = vst.msk [vmem:[#allocation2 + $0x8] sm:$0xf] %vm773, %v752
        %776 = vst.msk [vmem:[#allocation2 + $0x10] sm:$0xf] %vm773, %v754
        %777 = vst.msk [vmem:[#allocation2 + $0x18] sm:$0xf] %vm773, %v756
        %778 = vst.msk [vmem:[#allocation2 + $0x20] sm:$0xf] %vm773, %v758
        %779 = vst.msk [vmem:[#allocation2 + $0x28] sm:$0xf] %vm773, %v760
        %780 = vst.msk [vmem:[#allocation2 + $0x30] sm:$0xf] %vm773, %v762
        %781 = vst.msk [vmem:[#allocation2 + $0x38] sm:$0xf] %vm773, %v764
        %v782 = vld [vmem:[%s732] sm:$0xf]
        %v783 = vld [vmem:[%s732 + $0x4] sm:$0x1]
        %v784 = vld [vmem:[%s732 + $0x8] sm:$0xf]
        %v785 = vld [vmem:[%s732 + $0xc] sm:$0x1]
        %v786 = vld [vmem:[%s732 + $0x10] sm:$0xf]
        %v787 = vld [vmem:[%s732 + $0x14] sm:$0x1]
        %v788 = vld [vmem:[%s732 + $0x18] sm:$0xf]
        %v789 = vld [vmem:[%s732 + $0x1c] sm:$0x1]
        %v790 = vld [vmem:[%s732 + $0x20] sm:$0xf]
        %v791 = vld [vmem:[%s732 + $0x24] sm:$0x1]
        %v792 = vld [vmem:[%s732 + $0x28] sm:$0xf]
        %v793 = vld [vmem:[%s732 + $0x2c] sm:$0x1]
        %v794 = vld [vmem:[%s732 + $0x30] sm:$0xf]
        %v795 = vld [vmem:[%s732 + $0x34] sm:$0x1]
        %v796 = vld [vmem:[%s732 + $0x38] sm:$0xf]
        %v797 = vld [vmem:[%s732 + $0x3c] sm:$0x1]
        %v799 = vshrl.u32 %v782, 16
        %v801 = vrot.slane %v799, 4
        %v802 = vshll.u32 %v782, 16
        %v804 = vrot.slane %v802, 5
        %v805 = vor.u32 %v801, %v804
        %v806 = vrot.slane %v805, 4
        %v808 = vshll.u32 %v783, 16
        %v810 = vrot.slane %v808, 5
        %v811 = vsel %vm190, %v806, %v810
        %v813 = vshrl.u32 %v784, 16
        %v815 = vrot.slane %v813, 4
        %v816 = vshll.u32 %v784, 16
        %v818 = vrot.slane %v816, 5
        %v819 = vor.u32 %v815, %v818
        %v820 = vrot.slane %v819, 4
        %v822 = vshll.u32 %v785, 16
        %v824 = vrot.slane %v822, 5
        %v825 = vsel %vm190, %v820, %v824
        %v827 = vshrl.u32 %v786, 16
        %v829 = vrot.slane %v827, 4
        %v830 = vshll.u32 %v786, 16
        %v832 = vrot.slane %v830, 5
        %v833 = vor.u32 %v829, %v832
        %v834 = vrot.slane %v833, 4
        %v836 = vshll.u32 %v787, 16
        %v838 = vrot.slane %v836, 5
        %v839 = vsel %vm190, %v834, %v838
        %v841 = vshrl.u32 %v788, 16
        %v843 = vrot.slane %v841, 4
        %v844 = vshll.u32 %v788, 16
        %v846 = vrot.slane %v844, 5
        %v847 = vor.u32 %v843, %v846
        %v848 = vrot.slane %v847, 4
        %v850 = vshll.u32 %v789, 16
        %v852 = vrot.slane %v850, 5
        %v853 = vsel %vm190, %v848, %v852
        %v855 = vshrl.u32 %v790, 16
        %v857 = vrot.slane %v855, 4
        %v858 = vshll.u32 %v790, 16
        %v860 = vrot.slane %v858, 5
        %v861 = vor.u32 %v857, %v860
        %v862 = vrot.slane %v861, 4
        %v864 = vshll.u32 %v791, 16
        %v866 = vrot.slane %v864, 5
        %v867 = vsel %vm190, %v862, %v866
        %v869 = vshrl.u32 %v792, 16
        %v871 = vrot.slane %v869, 4
        %v872 = vshll.u32 %v792, 16
        %v874 = vrot.slane %v872, 5
        %v875 = vor.u32 %v871, %v874
        %v876 = vrot.slane %v875, 4
        %v878 = vshll.u32 %v793, 16
        %v880 = vrot.slane %v878, 5
        %v881 = vsel %vm190, %v876, %v880
        %v883 = vshrl.u32 %v794, 16
        %v885 = vrot.slane %v883, 4
        %v886 = vshll.u32 %v794, 16
        %v888 = vrot.slane %v886, 5
        %v889 = vor.u32 %v885, %v888
        %v890 = vrot.slane %v889, 4
        %v892 = vshll.u32 %v795, 16
        %v894 = vrot.slane %v892, 5
        %v895 = vsel %vm190, %v890, %v894
        %v897 = vshrl.u32 %v796, 16
        %v899 = vrot.slane %v897, 4
        %v900 = vshll.u32 %v796, 16
        %v902 = vrot.slane %v900, 5
        %v903 = vor.u32 %v899, %v902
        %v904 = vrot.slane %v903, 4
        %v906 = vshll.u32 %v797, 16
        %v908 = vrot.slane %v906, 5
        %v909 = vsel %vm190, %v904, %v908
        %910 = vrot.lane.b32.xlu0 %v811, 48
        %v911 = vpop.permute.xlu0 %910
        %912 = vrot.lane.b32.xlu0 %v825, 48
        %v913 = vpop.permute.xlu0 %912
        %914 = vrot.lane.b32.xlu0 %v839, 48
        %v915 = vpop.permute.xlu0 %914
        %916 = vrot.lane.b32.xlu0 %v853, 48
        %v917 = vpop.permute.xlu0 %916
        %918 = vrot.lane.b32.xlu0 %v867, 48
        %v919 = vpop.permute.xlu0 %918
        %920 = vrot.lane.b32.xlu0 %v881, 48
        %v921 = vpop.permute.xlu0 %920
        %922 = vrot.lane.b32.xlu0 %v895, 48
        %v923 = vpop.permute.xlu0 %922
        %924 = vrot.lane.b32.xlu0 %v909, 48
        %v925 = vpop.permute.xlu0 %924
        %vm934 = vcmask 454016
        %935 = vst.msk [vmem:[#allocation2] sm:$0xf] %vm934, %v911
        %936 = vst.msk [vmem:[#allocation2 + $0x8] sm:$0xf] %vm934, %v913
        %937 = vst.msk [vmem:[#allocation2 + $0x10] sm:$0xf] %vm934, %v915
        %938 = vst.msk [vmem:[#allocation2 + $0x18] sm:$0xf] %vm934, %v917
        %939 = vst.msk [vmem:[#allocation2 + $0x20] sm:$0xf] %vm934, %v919
        %940 = vst.msk [vmem:[#allocation2 + $0x28] sm:$0xf] %vm934, %v921
        %941 = vst.msk [vmem:[#allocation2 + $0x30] sm:$0xf] %vm934, %v923
        %942 = vst.msk [vmem:[#allocation2 + $0x38] sm:$0xf] %vm934, %v925
        %v943 = vld [vmem:[%s732] sm:$0xe]
        %v944 = vld [vmem:[%s732 + $0x4] sm:$0x1]
        %v945 = vld [vmem:[%s732 + $0x8] sm:$0xe]
        %v946 = vld [vmem:[%s732 + $0xc] sm:$0x1]
        %v947 = vld [vmem:[%s732 + $0x10] sm:$0xe]
        %v948 = vld [vmem:[%s732 + $0x14] sm:$0x1]
        %v949 = vld [vmem:[%s732 + $0x18] sm:$0xe]
        %v950 = vld [vmem:[%s732 + $0x1c] sm:$0x1]
        %v951 = vld [vmem:[%s732 + $0x20] sm:$0xe]
        %v952 = vld [vmem:[%s732 + $0x24] sm:$0x1]
        %v953 = vld [vmem:[%s732 + $0x28] sm:$0xe]
        %v954 = vld [vmem:[%s732 + $0x2c] sm:$0x1]
        %v955 = vld [vmem:[%s732 + $0x30] sm:$0xe]
        %v956 = vld [vmem:[%s732 + $0x34] sm:$0x1]
        %v957 = vld [vmem:[%s732 + $0x38] sm:$0xe]
        %v958 = vld [vmem:[%s732 + $0x3c] sm:$0x1]
        %v975 = vrot.slane %v943, 5
        %v976 = vrot.slane %v975, 4
        %v977 = vrot.slane %v944, 5
        %v978 = vsel %vm370, %v976, %v977
        %v979 = vrot.slane %v945, 5
        %v980 = vrot.slane %v979, 4
        %v981 = vrot.slane %v946, 5
        %v982 = vsel %vm370, %v980, %v981
        %v983 = vrot.slane %v947, 5
        %v984 = vrot.slane %v983, 4
        %v985 = vrot.slane %v948, 5
        %v986 = vsel %vm370, %v984, %v985
        %v987 = vrot.slane %v949, 5
        %v988 = vrot.slane %v987, 4
        %v989 = vrot.slane %v950, 5
        %v990 = vsel %vm370, %v988, %v989
        %v991 = vrot.slane %v951, 5
        %v992 = vrot.slane %v991, 4
        %v993 = vrot.slane %v952, 5
        %v994 = vsel %vm370, %v992, %v993
        %v995 = vrot.slane %v953, 5
        %v996 = vrot.slane %v995, 4
        %v997 = vrot.slane %v954, 5
        %v998 = vsel %vm370, %v996, %v997
        %v999 = vrot.slane %v955, 5
        %v1000 = vrot.slane %v999, 4
        %v1001 = vrot.slane %v956, 5
        %v1002 = vsel %vm370, %v1000, %v1001
        %v1003 = vrot.slane %v957, 5
        %v1004 = vrot.slane %v1003, 4
        %v1005 = vrot.slane %v958, 5
        %v1006 = vsel %vm370, %v1004, %v1005
        %1007 = vrot.lane.b32.xlu0 %v978, 56
        %v1008 = vpop.permute.xlu0 %1007
        %1009 = vrot.lane.b32.xlu0 %v982, 56
        %v1010 = vpop.permute.xlu0 %1009
        %1011 = vrot.lane.b32.xlu0 %v986, 56
        %v1012 = vpop.permute.xlu0 %1011
        %1013 = vrot.lane.b32.xlu0 %v990, 56
        %v1014 = vpop.permute.xlu0 %1013
        %1015 = vrot.lane.b32.xlu0 %v994, 56
        %v1016 = vpop.permute.xlu0 %1015
        %1017 = vrot.lane.b32.xlu0 %v998, 56
        %v1018 = vpop.permute.xlu0 %1017
        %1019 = vrot.lane.b32.xlu0 %v1002, 56
        %v1020 = vpop.permute.xlu0 %1019
        %1021 = vrot.lane.b32.xlu0 %v1006, 56
        %v1022 = vpop.permute.xlu0 %1021
        %vm1031 = vcmask 519616
        %1032 = vst.msk [vmem:[#allocation2] sm:$0xf] %vm1031, %v1008
        %1033 = vst.msk [vmem:[#allocation2 + $0x8] sm:$0xf] %vm1031, %v1010
        %1034 = vst.msk [vmem:[#allocation2 + $0x10] sm:$0xf] %vm1031, %v1012
        %1035 = vst.msk [vmem:[#allocation2 + $0x18] sm:$0xf] %vm1031, %v1014
        %1036 = vst.msk [vmem:[#allocation2 + $0x20] sm:$0xf] %vm1031, %v1016
        %1037 = vst.msk [vmem:[#allocation2 + $0x28] sm:$0xf] %vm1031, %v1018
        %1038 = vst.msk [vmem:[#allocation2 + $0x30] sm:$0xf] %vm1031, %v1020
        %1039 = vst.msk [vmem:[#allocation2 + $0x38] sm:$0xf] %vm1031, %v1022
        %v1040 = vld [vmem:[%s732] sm:$0xe]
        %v1041 = vld [vmem:[%s732 + $0x4] sm:$0x3]
        %v1042 = vld [vmem:[%s732 + $0x8] sm:$0xe]
        %v1043 = vld [vmem:[%s732 + $0xc] sm:$0x3]
        %v1044 = vld [vmem:[%s732 + $0x10] sm:$0xe]
        %v1045 = vld [vmem:[%s732 + $0x14] sm:$0x3]
        %v1046 = vld [vmem:[%s732 + $0x18] sm:$0xe]
        %v1047 = vld [vmem:[%s732 + $0x1c] sm:$0x3]
        %v1048 = vld [vmem:[%s732 + $0x20] sm:$0xe]
        %v1049 = vld [vmem:[%s732 + $0x24] sm:$0x3]
        %v1050 = vld [vmem:[%s732 + $0x28] sm:$0xe]
        %v1051 = vld [vmem:[%s732 + $0x2c] sm:$0x3]
        %v1052 = vld [vmem:[%s732 + $0x30] sm:$0xe]
        %v1053 = vld [vmem:[%s732 + $0x34] sm:$0x3]
        %v1054 = vld [vmem:[%s732 + $0x38] sm:$0xe]
        %v1055 = vld [vmem:[%s732 + $0x3c] sm:$0x3]
        %v1057 = vshrl.u32 %v1040, 16
        %v1059 = vrot.slane %v1057, 5
        %v1060 = vshll.u32 %v1040, 16
        %v1062 = vrot.slane %v1060, 6
        %v1063 = vor.u32 %v1059, %v1062
        %v1064 = vrot.slane %v1063, 4
        %v1066 = vshrl.u32 %v1041, 16
        %v1068 = vrot.slane %v1066, 5
        %v1069 = vshll.u32 %v1041, 16
        %v1071 = vrot.slane %v1069, 6
        %v1072 = vor.u32 %v1068, %v1071
        %v1073 = vsel %vm454, %v1064, %v1072
        %v1075 = vshrl.u32 %v1042, 16
        %v1077 = vrot.slane %v1075, 5
        %v1078 = vshll.u32 %v1042, 16
        %v1080 = vrot.slane %v1078, 6
        %v1081 = vor.u32 %v1077, %v1080
        %v1082 = vrot.slane %v1081, 4
        %v1084 = vshrl.u32 %v1043, 16
        %v1086 = vrot.slane %v1084, 5
        %v1087 = vshll.u32 %v1043, 16
        %v1089 = vrot.slane %v1087, 6
        %v1090 = vor.u32 %v1086, %v1089
        %v1091 = vsel %vm454, %v1082, %v1090
        %v1093 = vshrl.u32 %v1044, 16
        %v1095 = vrot.slane %v1093, 5
        %v1096 = vshll.u32 %v1044, 16
        %v1098 = vrot.slane %v1096, 6
        %v1099 = vor.u32 %v1095, %v1098
        %v1100 = vrot.slane %v1099, 4
        %v1102 = vshrl.u32 %v1045, 16
        %v1104 = vrot.slane %v1102, 5
        %v1105 = vshll.u32 %v1045, 16
        %v1107 = vrot.slane %v1105, 6
        %v1108 = vor.u32 %v1104, %v1107
        %v1109 = vsel %vm454, %v1100, %v1108
        %v1111 = vshrl.u32 %v1046, 16
        %v1113 = vrot.slane %v1111, 5
        %v1114 = vshll.u32 %v1046, 16
        %v1116 = vrot.slane %v1114, 6
        %v1117 = vor.u32 %v1113, %v1116
        %v1118 = vrot.slane %v1117, 4
        %v1120 = vshrl.u32 %v1047, 16
        %v1122 = vrot.slane %v1120, 5
        %v1123 = vshll.u32 %v1047, 16
        %v1125 = vrot.slane %v1123, 6
        %v1126 = vor.u32 %v1122, %v1125
        %v1127 = vsel %vm454, %v1118, %v1126
        %v1129 = vshrl.u32 %v1048, 16
        %v1131 = vrot.slane %v1129, 5
        %v1132 = vshll.u32 %v1048, 16
        %v1134 = vrot.slane %v1132, 6
        %v1135 = vor.u32 %v1131, %v1134
        %v1136 = vrot.slane %v1135, 4
        %v1138 = vshrl.u32 %v1049, 16
        %v1140 = vrot.slane %v1138, 5
        %v1141 = vshll.u32 %v1049, 16
        %v1143 = vrot.slane %v1141, 6
        %v1144 = vor.u32 %v1140, %v1143
        %v1145 = vsel %vm454, %v1136, %v1144
        %v1147 = vshrl.u32 %v1050, 16
        %v1149 = vrot.slane %v1147, 5
        %v1150 = vshll.u32 %v1050, 16
        %v1152 = vrot.slane %v1150, 6
        %v1153 = vor.u32 %v1149, %v1152
        %v1154 = vrot.slane %v1153, 4
        %v1156 = vshrl.u32 %v1051, 16
        %v1158 = vrot.slane %v1156, 5
        %v1159 = vshll.u32 %v1051, 16
        %v1161 = vrot.slane %v1159, 6
        %v1162 = vor.u32 %v1158, %v1161
        %v1163 = vsel %vm454, %v1154, %v1162
        %v1165 = vshrl.u32 %v1052, 16
        %v1167 = vrot.slane %v1165, 5
        %v1168 = vshll.u32 %v1052, 16
        %v1170 = vrot.slane %v1168, 6
        %v1171 = vor.u32 %v1167, %v1170
        %v1172 = vrot.slane %v1171, 4
        %v1174 = vshrl.u32 %v1053, 16
        %v1176 = vrot.slane %v1174, 5
        %v1177 = vshll.u32 %v1053, 16
        %v1179 = vrot.slane %v1177, 6
        %v1180 = vor.u32 %v1176, %v1179
        %v1181 = vsel %vm454, %v1172, %v1180
        %v1183 = vshrl.u32 %v1054, 16
        %v1185 = vrot.slane %v1183, 5
        %v1186 = vshll.u32 %v1054, 16
        %v1188 = vrot.slane %v1186, 6
        %v1189 = vor.u32 %v1185, %v1188
        %v1190 = vrot.slane %v1189, 4
        %v1192 = vshrl.u32 %v1055, 16
        %v1194 = vrot.slane %v1192, 5
        %v1195 = vshll.u32 %v1055, 16
        %v1197 = vrot.slane %v1195, 6
        %v1198 = vor.u32 %v1194, %v1197
        %v1199 = vsel %vm454, %v1190, %v1198
        %1200 = vrot.lane.b32.xlu0 %v1073, 64
        %v1201 = vpop.permute.xlu0 %1200
        %1202 = vrot.lane.b32.xlu0 %v1091, 64
        %v1203 = vpop.permute.xlu0 %1202
        %1204 = vrot.lane.b32.xlu0 %v1109, 64
        %v1205 = vpop.permute.xlu0 %1204
        %1206 = vrot.lane.b32.xlu0 %v1127, 64
        %v1207 = vpop.permute.xlu0 %1206
        %1208 = vrot.lane.b32.xlu0 %v1145, 64
        %v1209 = vpop.permute.xlu0 %1208
        %1210 = vrot.lane.b32.xlu0 %v1163, 64
        %v1211 = vpop.permute.xlu0 %1210
        %1212 = vrot.lane.b32.xlu0 %v1181, 64
        %v1213 = vpop.permute.xlu0 %1212
        %1214 = vrot.lane.b32.xlu0 %v1199, 64
        %v1215 = vpop.permute.xlu0 %1214
        %vm1224 = vcmask 585216
        %1225 = vst.msk [vmem:[#allocation2] sm:$0xf] %vm1224, %v1201
        %1226 = vst.msk [vmem:[#allocation2 + $0x8] sm:$0xf] %vm1224, %v1203
        %1227 = vst.msk [vmem:[#allocation2 + $0x10] sm:$0xf] %vm1224, %v1205
        %1228 = vst.msk [vmem:[#allocation2 + $0x18] sm:$0xf] %vm1224, %v1207
        %1229 = vst.msk [vmem:[#allocation2 + $0x20] sm:$0xf] %vm1224, %v1209
        %1230 = vst.msk [vmem:[#allocation2 + $0x28] sm:$0xf] %vm1224, %v1211
        %1231 = vst.msk [vmem:[#allocation2 + $0x30] sm:$0xf] %vm1224, %v1213
        %1232 = vst.msk [vmem:[#allocation2 + $0x38] sm:$0xf] %vm1224, %v1215
        %v1233 = vld [vmem:[%s732] sm:$0xc]
        %v1234 = vld [vmem:[%s732 + $0x4] sm:$0x3]
        %v1235 = vld [vmem:[%s732 + $0x8] sm:$0xc]
        %v1236 = vld [vmem:[%s732 + $0xc] sm:$0x3]
        %v1237 = vld [vmem:[%s732 + $0x10] sm:$0xc]
        %v1238 = vld [vmem:[%s732 + $0x14] sm:$0x3]
        %v1239 = vld [vmem:[%s732 + $0x18] sm:$0xc]
        %v1240 = vld [vmem:[%s732 + $0x1c] sm:$0x3]
        %v1241 = vld [vmem:[%s732 + $0x20] sm:$0xc]
        %v1242 = vld [vmem:[%s732 + $0x24] sm:$0x3]
        %v1243 = vld [vmem:[%s732 + $0x28] sm:$0xc]
        %v1244 = vld [vmem:[%s732 + $0x2c] sm:$0x3]
        %v1245 = vld [vmem:[%s732 + $0x30] sm:$0xc]
        %v1246 = vld [vmem:[%s732 + $0x34] sm:$0x3]
        %v1247 = vld [vmem:[%s732 + $0x38] sm:$0xc]
        %v1248 = vld [vmem:[%s732 + $0x3c] sm:$0x3]
        %v1265 = vrot.slane %v1233, 6
        %v1266 = vrot.slane %v1265, 4
        %v1267 = vrot.slane %v1234, 6
        %v1268 = vsel %vm666, %v1266, %v1267
        %v1269 = vrot.slane %v1235, 6
        %v1270 = vrot.slane %v1269, 4
        %v1271 = vrot.slane %v1236, 6
        %v1272 = vsel %vm666, %v1270, %v1271
        %v1273 = vrot.slane %v1237, 6
        %v1274 = vrot.slane %v1273, 4
        %v1275 = vrot.slane %v1238, 6
        %v1276 = vsel %vm666, %v1274, %v1275
        %v1277 = vrot.slane %v1239, 6
        %v1278 = vrot.slane %v1277, 4
        %v1279 = vrot.slane %v1240, 6
        %v1280 = vsel %vm666, %v1278, %v1279
        %v1281 = vrot.slane %v1241, 6
        %v1282 = vrot.slane %v1281, 4
        %v1283 = vrot.slane %v1242, 6
        %v1284 = vsel %vm666, %v1282, %v1283
        %v1285 = vrot.slane %v1243, 6
        %v1286 = vrot.slane %v1285, 4
        %v1287 = vrot.slane %v1244, 6
        %v1288 = vsel %vm666, %v1286, %v1287
        %v1289 = vrot.slane %v1245, 6
        %v1290 = vrot.slane %v1289, 4
        %v1291 = vrot.slane %v1246, 6
        %v1292 = vsel %vm666, %v1290, %v1291
        %v1293 = vrot.slane %v1247, 6
        %v1294 = vrot.slane %v1293, 4
        %v1295 = vrot.slane %v1248, 6
        %v1296 = vsel %vm666, %v1294, %v1295
        %1297 = vrot.lane.b32.xlu0 %v1268, 72
        %v1298 = vpop.permute.xlu0 %1297
        %1299 = vrot.lane.b32.xlu0 %v1272, 72
        %v1300 = vpop.permute.xlu0 %1299
        %1301 = vrot.lane.b32.xlu0 %v1276, 72
        %v1302 = vpop.permute.xlu0 %1301
        %1303 = vrot.lane.b32.xlu0 %v1280, 72
        %v1304 = vpop.permute.xlu0 %1303
        %1305 = vrot.lane.b32.xlu0 %v1284, 72
        %v1306 = vpop.permute.xlu0 %1305
        %1307 = vrot.lane.b32.xlu0 %v1288, 72
        %v1308 = vpop.permute.xlu0 %1307
        %1309 = vrot.lane.b32.xlu0 %v1292, 72
        %v1310 = vpop.permute.xlu0 %1309
        %1311 = vrot.lane.b32.xlu0 %v1296, 72
        %v1312 = vpop.permute.xlu0 %1311
        %vm1321 = vcmask 650816
        %1322 = vst.msk [vmem:[#allocation2] sm:$0xf] %vm1321, %v1298
        %1323 = vst.msk [vmem:[#allocation2 + $0x8] sm:$0xf] %vm1321, %v1300
        %1324 = vst.msk [vmem:[#allocation2 + $0x10] sm:$0xf] %vm1321, %v1302
        %1325 = vst.msk [vmem:[#allocation2 + $0x18] sm:$0xf] %vm1321, %v1304
        %1326 = vst.msk [vmem:[#allocation2 + $0x20] sm:$0xf] %vm1321, %v1306
        %1327 = vst.msk [vmem:[#allocation2 + $0x28] sm:$0xf] %vm1321, %v1308
        %1328 = vst.msk [vmem:[#allocation2 + $0x30] sm:$0xf] %vm1321, %v1310
        %1329 = vst.msk [vmem:[#allocation2 + $0x38] sm:$0xf] %vm1321, %v1312
        %s1330 = scalar_lea.vmem %s141, 16
        %v1331 = vld [vmem:[%s1330] sm:$0xf]
        %v1332 = vld [vmem:[%s1330 + $0x8] sm:$0xf]
        %v1333 = vld [vmem:[%s1330 + $0x10] sm:$0xf]
        %v1334 = vld [vmem:[%s1330 + $0x18] sm:$0xf]
        %v1335 = vld [vmem:[%s1330 + $0x20] sm:$0xf]
        %v1336 = vld [vmem:[%s1330 + $0x28] sm:$0xf]
        %v1337 = vld [vmem:[%s1330 + $0x30] sm:$0xf]
        %v1338 = vld [vmem:[%s1330 + $0x38] sm:$0xf]
        %1347 = vrot.lane.b32.xlu0 %v1331, 80
        %v1348 = vpop.permute.xlu0 %1347
        %1349 = vrot.lane.b32.xlu0 %v1332, 80
        %v1350 = vpop.permute.xlu0 %1349
        %1351 = vrot.lane.b32.xlu0 %v1333, 80
        %v1352 = vpop.permute.xlu0 %1351
        %1353 = vrot.lane.b32.xlu0 %v1334, 80
        %v1354 = vpop.permute.xlu0 %1353
        %1355 = vrot.lane.b32.xlu0 %v1335, 80
        %v1356 = vpop.permute.xlu0 %1355
        %1357 = vrot.lane.b32.xlu0 %v1336, 80
        %v1358 = vpop.permute.xlu0 %1357
        %1359 = vrot.lane.b32.xlu0 %v1337, 80
        %v1360 = vpop.permute.xlu0 %1359
        %1361 = vrot.lane.b32.xlu0 %v1338, 80
        %v1362 = vpop.permute.xlu0 %1361
        %vm1371 = vcmask 716416
        %1372 = vst.msk [vmem:[#allocation2] sm:$0xf] %vm1371, %v1348
        %1373 = vst.msk [vmem:[#allocation2 + $0x8] sm:$0xf] %vm1371, %v1350
        %1374 = vst.msk [vmem:[#allocation2 + $0x10] sm:$0xf] %vm1371, %v1352
        %1375 = vst.msk [vmem:[#allocation2 + $0x18] sm:$0xf] %vm1371, %v1354
        %1376 = vst.msk [vmem:[#allocation2 + $0x20] sm:$0xf] %vm1371, %v1356
        %1377 = vst.msk [vmem:[#allocation2 + $0x28] sm:$0xf] %vm1371, %v1358
        %1378 = vst.msk [vmem:[#allocation2 + $0x30] sm:$0xf] %vm1371, %v1360
        %1379 = vst.msk [vmem:[#allocation2 + $0x38] sm:$0xf] %vm1371, %v1362
        %v1380 = vld [vmem:[%s1330] sm:$0xf]
        %v1381 = vld [vmem:[%s1330 + $0x4] sm:$0x1]
        %v1382 = vld [vmem:[%s1330 + $0x8] sm:$0xf]
        %v1383 = vld [vmem:[%s1330 + $0xc] sm:$0x1]
        %v1384 = vld [vmem:[%s1330 + $0x10] sm:$0xf]
        %v1385 = vld [vmem:[%s1330 + $0x14] sm:$0x1]
        %v1386 = vld [vmem:[%s1330 + $0x18] sm:$0xf]
        %v1387 = vld [vmem:[%s1330 + $0x1c] sm:$0x1]
        %v1388 = vld [vmem:[%s1330 + $0x20] sm:$0xf]
        %v1389 = vld [vmem:[%s1330 + $0x24] sm:$0x1]
        %v1390 = vld [vmem:[%s1330 + $0x28] sm:$0xf]
        %v1391 = vld [vmem:[%s1330 + $0x2c] sm:$0x1]
        %v1392 = vld [vmem:[%s1330 + $0x30] sm:$0xf]
        %v1393 = vld [vmem:[%s1330 + $0x34] sm:$0x1]
        %v1394 = vld [vmem:[%s1330 + $0x38] sm:$0xf]
        %v1395 = vld [vmem:[%s1330 + $0x3c] sm:$0x1]
        %v1397 = vshrl.u32 %v1380, 16
        %v1399 = vrot.slane %v1397, 4
        %v1400 = vshll.u32 %v1380, 16
        %v1402 = vrot.slane %v1400, 5
        %v1403 = vor.u32 %v1399, %v1402
        %v1404 = vrot.slane %v1403, 4
        %v1406 = vshll.u32 %v1381, 16
        %v1408 = vrot.slane %v1406, 5
        %v1409 = vsel %vm190, %v1404, %v1408
        %v1411 = vshrl.u32 %v1382, 16
        %v1413 = vrot.slane %v1411, 4
        %v1414 = vshll.u32 %v1382, 16
        %v1416 = vrot.slane %v1414, 5
        %v1417 = vor.u32 %v1413, %v1416
        %v1418 = vrot.slane %v1417, 4
        %v1420 = vshll.u32 %v1383, 16
        %v1422 = vrot.slane %v1420, 5
        %v1423 = vsel %vm190, %v1418, %v1422
        %v1425 = vshrl.u32 %v1384, 16
        %v1427 = vrot.slane %v1425, 4
        %v1428 = vshll.u32 %v1384, 16
        %v1430 = vrot.slane %v1428, 5
        %v1431 = vor.u32 %v1427, %v1430
        %v1432 = vrot.slane %v1431, 4
        %v1434 = vshll.u32 %v1385, 16
        %v1436 = vrot.slane %v1434, 5
        %v1437 = vsel %vm190, %v1432, %v1436
        %v1439 = vshrl.u32 %v1386, 16
        %v1441 = vrot.slane %v1439, 4
        %v1442 = vshll.u32 %v1386, 16
        %v1444 = vrot.slane %v1442, 5
        %v1445 = vor.u32 %v1441, %v1444
        %v1446 = vrot.slane %v1445, 4
        %v1448 = vshll.u32 %v1387, 16
        %v1450 = vrot.slane %v1448, 5
        %v1451 = vsel %vm190, %v1446, %v1450
        %v1453 = vshrl.u32 %v1388, 16
        %v1455 = vrot.slane %v1453, 4
        %v1456 = vshll.u32 %v1388, 16
        %v1458 = vrot.slane %v1456, 5
        %v1459 = vor.u32 %v1455, %v1458
        %v1460 = vrot.slane %v1459, 4
        %v1462 = vshll.u32 %v1389, 16
        %v1464 = vrot.slane %v1462, 5
        %v1465 = vsel %vm190, %v1460, %v1464
        %v1467 = vshrl.u32 %v1390, 16
        %v1469 = vrot.slane %v1467, 4
        %v1470 = vshll.u32 %v1390, 16
        %v1472 = vrot.slane %v1470, 5
        %v1473 = vor.u32 %v1469, %v1472
        %v1474 = vrot.slane %v1473, 4
        %v1476 = vshll.u32 %v1391, 16
        %v1478 = vrot.slane %v1476, 5
        %v1479 = vsel %vm190, %v1474, %v1478
        %v1481 = vshrl.u32 %v1392, 16
        %v1483 = vrot.slane %v1481, 4
        %v1484 = vshll.u32 %v1392, 16
        %v1486 = vrot.slane %v1484, 5
        %v1487 = vor.u32 %v1483, %v1486
        %v1488 = vrot.slane %v1487, 4
        %v1490 = vshll.u32 %v1393, 16
        %v1492 = vrot.slane %v1490, 5
        %v1493 = vsel %vm190, %v1488, %v1492
        %v1495 = vshrl.u32 %v1394, 16
        %v1497 = vrot.slane %v1495, 4
        %v1498 = vshll.u32 %v1394, 16
        %v1500 = vrot.slane %v1498, 5
        %v1501 = vor.u32 %v1497, %v1500
        %v1502 = vrot.slane %v1501, 4
        %v1504 = vshll.u32 %v1395, 16
        %v1506 = vrot.slane %v1504, 5
        %v1507 = vsel %vm190, %v1502, %v1506
        %1508 = vrot.lane.b32.xlu0 %v1409, 88
        %v1509 = vpop.permute.xlu0 %1508
        %1510 = vrot.lane.b32.xlu0 %v1423, 88
        %v1511 = vpop.permute.xlu0 %1510
        %1512 = vrot.lane.b32.xlu0 %v1437, 88
        %v1513 = vpop.permute.xlu0 %1512
        %1514 = vrot.lane.b32.xlu0 %v1451, 88
        %v1515 = vpop.permute.xlu0 %1514
        %1516 = vrot.lane.b32.xlu0 %v1465, 88
        %v1517 = vpop.permute.xlu0 %1516
        %1518 = vrot.lane.b32.xlu0 %v1479, 88
        %v1519 = vpop.permute.xlu0 %1518
        %1520 = vrot.lane.b32.xlu0 %v1493, 88
        %v1521 = vpop.permute.xlu0 %1520
        %1522 = vrot.lane.b32.xlu0 %v1507, 88
        %v1523 = vpop.permute.xlu0 %1522
        %vm1532 = vcmask 782016
        %1533 = vst.msk [vmem:[#allocation2] sm:$0xf] %vm1532, %v1509
        %1534 = vst.msk [vmem:[#allocation2 + $0x8] sm:$0xf] %vm1532, %v1511
        %1535 = vst.msk [vmem:[#allocation2 + $0x10] sm:$0xf] %vm1532, %v1513
        %1536 = vst.msk [vmem:[#allocation2 + $0x18] sm:$0xf] %vm1532, %v1515
        %1537 = vst.msk [vmem:[#allocation2 + $0x20] sm:$0xf] %vm1532, %v1517
        %1538 = vst.msk [vmem:[#allocation2 + $0x28] sm:$0xf] %vm1532, %v1519
        %1539 = vst.msk [vmem:[#allocation2 + $0x30] sm:$0xf] %vm1532, %v1521
        %1540 = vst.msk [vmem:[#allocation2 + $0x38] sm:$0xf] %vm1532, %v1523
        %v1541 = vld [vmem:[%s1330] sm:$0xe]
        %v1542 = vld [vmem:[%s1330 + $0x4] sm:$0x1]
        %v1543 = vld [vmem:[%s1330 + $0x8] sm:$0xe]
        %v1544 = vld [vmem:[%s1330 + $0xc] sm:$0x1]
        %v1545 = vld [vmem:[%s1330 + $0x10] sm:$0xe]
        %v1546 = vld [vmem:[%s1330 + $0x14] sm:$0x1]
        %v1547 = vld [vmem:[%s1330 + $0x18] sm:$0xe]
        %v1548 = vld [vmem:[%s1330 + $0x1c] sm:$0x1]
        %v1549 = vld [vmem:[%s1330 + $0x20] sm:$0xe]
        %v1550 = vld [vmem:[%s1330 + $0x24] sm:$0x1]
        %v1551 = vld [vmem:[%s1330 + $0x28] sm:$0xe]
        %v1552 = vld [vmem:[%s1330 + $0x2c] sm:$0x1]
        %v1553 = vld [vmem:[%s1330 + $0x30] sm:$0xe]
        %v1554 = vld [vmem:[%s1330 + $0x34] sm:$0x1]
        %v1555 = vld [vmem:[%s1330 + $0x38] sm:$0xe]
        %v1556 = vld [vmem:[%s1330 + $0x3c] sm:$0x1]
        %v1573 = vrot.slane %v1541, 5
        %v1574 = vrot.slane %v1573, 4
        %v1575 = vrot.slane %v1542, 5
        %v1576 = vsel %vm370, %v1574, %v1575
        %v1577 = vrot.slane %v1543, 5
        %v1578 = vrot.slane %v1577, 4
        %v1579 = vrot.slane %v1544, 5
        %v1580 = vsel %vm370, %v1578, %v1579
        %v1581 = vrot.slane %v1545, 5
        %v1582 = vrot.slane %v1581, 4
        %v1583 = vrot.slane %v1546, 5
        %v1584 = vsel %vm370, %v1582, %v1583
        %v1585 = vrot.slane %v1547, 5
        %v1586 = vrot.slane %v1585, 4
        %v1587 = vrot.slane %v1548, 5
        %v1588 = vsel %vm370, %v1586, %v1587
        %v1589 = vrot.slane %v1549, 5
        %v1590 = vrot.slane %v1589, 4
        %v1591 = vrot.slane %v1550, 5
        %v1592 = vsel %vm370, %v1590, %v1591
        %v1593 = vrot.slane %v1551, 5
        %v1594 = vrot.slane %v1593, 4
        %v1595 = vrot.slane %v1552, 5
        %v1596 = vsel %vm370, %v1594, %v1595
        %v1597 = vrot.slane %v1553, 5
        %v1598 = vrot.slane %v1597, 4
        %v1599 = vrot.slane %v1554, 5
        %v1600 = vsel %vm370, %v1598, %v1599
        %v1601 = vrot.slane %v1555, 5
        %v1602 = vrot.slane %v1601, 4
        %v1603 = vrot.slane %v1556, 5
        %v1604 = vsel %vm370, %v1602, %v1603
        %1605 = vrot.lane.b32.xlu0 %v1576, 96
        %v1606 = vpop.permute.xlu0 %1605
        %1607 = vrot.lane.b32.xlu0 %v1580, 96
        %v1608 = vpop.permute.xlu0 %1607
        %1609 = vrot.lane.b32.xlu0 %v1584, 96
        %v1610 = vpop.permute.xlu0 %1609
        %1611 = vrot.lane.b32.xlu0 %v1588, 96
        %v1612 = vpop.permute.xlu0 %1611
        %1613 = vrot.lane.b32.xlu0 %v1592, 96
        %v1614 = vpop.permute.xlu0 %1613
        %1615 = vrot.lane.b32.xlu0 %v1596, 96
        %v1616 = vpop.permute.xlu0 %1615
        %1617 = vrot.lane.b32.xlu0 %v1600, 96
        %v1618 = vpop.permute.xlu0 %1617
        %1619 = vrot.lane.b32.xlu0 %v1604, 96
        %v1620 = vpop.permute.xlu0 %1619
        %vm1629 = vcmask 847616
        %1630 = vst.msk [vmem:[#allocation2] sm:$0xf] %vm1629, %v1606
        %1631 = vst.msk [vmem:[#allocation2 + $0x8] sm:$0xf] %vm1629, %v1608
        %1632 = vst.msk [vmem:[#allocation2 + $0x10] sm:$0xf] %vm1629, %v1610
        %1633 = vst.msk [vmem:[#allocation2 + $0x18] sm:$0xf] %vm1629, %v1612
        %1634 = vst.msk [vmem:[#allocation2 + $0x20] sm:$0xf] %vm1629, %v1614
        %1635 = vst.msk [vmem:[#allocation2 + $0x28] sm:$0xf] %vm1629, %v1616
        %1636 = vst.msk [vmem:[#allocation2 + $0x30] sm:$0xf] %vm1629, %v1618
        %1637 = vst.msk [vmem:[#allocation2 + $0x38] sm:$0xf] %vm1629, %v1620
        %v1638 = vld [vmem:[%s1330] sm:$0xe]
        %v1639 = vld [vmem:[%s1330 + $0x4] sm:$0x3]
        %v1640 = vld [vmem:[%s1330 + $0x8] sm:$0xe]
        %v1641 = vld [vmem:[%s1330 + $0xc] sm:$0x3]
        %v1642 = vld [vmem:[%s1330 + $0x10] sm:$0xe]
        %v1643 = vld [vmem:[%s1330 + $0x14] sm:$0x3]
        %v1644 = vld [vmem:[%s1330 + $0x18] sm:$0xe]
        %v1645 = vld [vmem:[%s1330 + $0x1c] sm:$0x3]
        %v1646 = vld [vmem:[%s1330 + $0x20] sm:$0xe]
        %v1647 = vld [vmem:[%s1330 + $0x24] sm:$0x3]
        %v1648 = vld [vmem:[%s1330 + $0x28] sm:$0xe]
        %v1649 = vld [vmem:[%s1330 + $0x2c] sm:$0x3]
        %v1650 = vld [vmem:[%s1330 + $0x30] sm:$0xe]
        %v1651 = vld [vmem:[%s1330 + $0x34] sm:$0x3]
        %v1652 = vld [vmem:[%s1330 + $0x38] sm:$0xe]
        %v1653 = vld [vmem:[%s1330 + $0x3c] sm:$0x3]
        %v1655 = vshrl.u32 %v1638, 16
        %v1657 = vrot.slane %v1655, 5
        %v1658 = vshll.u32 %v1638, 16
        %v1660 = vrot.slane %v1658, 6
        %v1661 = vor.u32 %v1657, %v1660
        %v1662 = vrot.slane %v1661, 4
        %v1664 = vshrl.u32 %v1639, 16
        %v1666 = vrot.slane %v1664, 5
        %v1667 = vshll.u32 %v1639, 16
        %v1669 = vrot.slane %v1667, 6
        %v1670 = vor.u32 %v1666, %v1669
        %v1671 = vsel %vm454, %v1662, %v1670
        %v1673 = vshrl.u32 %v1640, 16
        %v1675 = vrot.slane %v1673, 5
        %v1676 = vshll.u32 %v1640, 16
        %v1678 = vrot.slane %v1676, 6
        %v1679 = vor.u32 %v1675, %v1678
        %v1680 = vrot.slane %v1679, 4
        %v1682 = vshrl.u32 %v1641, 16
        %v1684 = vrot.slane %v1682, 5
        %v1685 = vshll.u32 %v1641, 16
        %v1687 = vrot.slane %v1685, 6
        %v1688 = vor.u32 %v1684, %v1687
        %v1689 = vsel %vm454, %v1680, %v1688
        %v1691 = vshrl.u32 %v1642, 16
        %v1693 = vrot.slane %v1691, 5
        %v1694 = vshll.u32 %v1642, 16
        %v1696 = vrot.slane %v1694, 6
        %v1697 = vor.u32 %v1693, %v1696
        %v1698 = vrot.slane %v1697, 4
        %v1700 = vshrl.u32 %v1643, 16
        %v1702 = vrot.slane %v1700, 5
        %v1703 = vshll.u32 %v1643, 16
        %v1705 = vrot.slane %v1703, 6
        %v1706 = vor.u32 %v1702, %v1705
        %v1707 = vsel %vm454, %v1698, %v1706
        %v1709 = vshrl.u32 %v1644, 16
        %v1711 = vrot.slane %v1709, 5
        %v1712 = vshll.u32 %v1644, 16
        %v1714 = vrot.slane %v1712, 6
        %v1715 = vor.u32 %v1711, %v1714
        %v1716 = vrot.slane %v1715, 4
        %v1718 = vshrl.u32 %v1645, 16
        %v1720 = vrot.slane %v1718, 5
        %v1721 = vshll.u32 %v1645, 16
        %v1723 = vrot.slane %v1721, 6
        %v1724 = vor.u32 %v1720, %v1723
        %v1725 = vsel %vm454, %v1716, %v1724
        %v1727 = vshrl.u32 %v1646, 16
        %v1729 = vrot.slane %v1727, 5
        %v1730 = vshll.u32 %v1646, 16
        %v1732 = vrot.slane %v1730, 6
        %v1733 = vor.u32 %v1729, %v1732
        %v1734 = vrot.slane %v1733, 4
        %v1736 = vshrl.u32 %v1647, 16
        %v1738 = vrot.slane %v1736, 5
        %v1739 = vshll.u32 %v1647, 16
        %v1741 = vrot.slane %v1739, 6
        %v1742 = vor.u32 %v1738, %v1741
        %v1743 = vsel %vm454, %v1734, %v1742
        %v1745 = vshrl.u32 %v1648, 16
        %v1747 = vrot.slane %v1745, 5
        %v1748 = vshll.u32 %v1648, 16
        %v1750 = vrot.slane %v1748, 6
        %v1751 = vor.u32 %v1747, %v1750
        %v1752 = vrot.slane %v1751, 4
        %v1754 = vshrl.u32 %v1649, 16
        %v1756 = vrot.slane %v1754, 5
        %v1757 = vshll.u32 %v1649, 16
        %v1759 = vrot.slane %v1757, 6
        %v1760 = vor.u32 %v1756, %v1759
        %v1761 = vsel %vm454, %v1752, %v1760
        %v1763 = vshrl.u32 %v1650, 16
        %v1765 = vrot.slane %v1763, 5
        %v1766 = vshll.u32 %v1650, 16
        %v1768 = vrot.slane %v1766, 6
        %v1769 = vor.u32 %v1765, %v1768
        %v1770 = vrot.slane %v1769, 4
        %v1772 = vshrl.u32 %v1651, 16
        %v1774 = vrot.slane %v1772, 5
        %v1775 = vshll.u32 %v1651, 16
        %v1777 = vrot.slane %v1775, 6
        %v1778 = vor.u32 %v1774, %v1777
        %v1779 = vsel %vm454, %v1770, %v1778
        %v1781 = vshrl.u32 %v1652, 16
        %v1783 = vrot.slane %v1781, 5
        %v1784 = vshll.u32 %v1652, 16
        %v1786 = vrot.slane %v1784, 6
        %v1787 = vor.u32 %v1783, %v1786
        %v1788 = vrot.slane %v1787, 4
        %v1790 = vshrl.u32 %v1653, 16
        %v1792 = vrot.slane %v1790, 5
        %v1793 = vshll.u32 %v1653, 16
        %v1795 = vrot.slane %v1793, 6
        %v1796 = vor.u32 %v1792, %v1795
        %v1797 = vsel %vm454, %v1788, %v1796
        %1798 = vrot.lane.b32.xlu0 %v1671, 104
        %v1799 = vpop.permute.xlu0 %1798
        %1800 = vrot.lane.b32.xlu0 %v1689, 104
        %v1801 = vpop.permute.xlu0 %1800
        %1802 = vrot.lane.b32.xlu0 %v1707, 104
        %v1803 = vpop.permute.xlu0 %1802
        %1804 = vrot.lane.b32.xlu0 %v1725, 104
        %v1805 = vpop.permute.xlu0 %1804
        %1806 = vrot.lane.b32.xlu0 %v1743, 104
        %v1807 = vpop.permute.xlu0 %1806
        %1808 = vrot.lane.b32.xlu0 %v1761, 104
        %v1809 = vpop.permute.xlu0 %1808
        %1810 = vrot.lane.b32.xlu0 %v1779, 104
        %v1811 = vpop.permute.xlu0 %1810
        %1812 = vrot.lane.b32.xlu0 %v1797, 104
        %v1813 = vpop.permute.xlu0 %1812
        %vm1822 = vcmask 913216
        %1823 = vst.msk [vmem:[#allocation2] sm:$0xf] %vm1822, %v1799
        %1824 = vst.msk [vmem:[#allocation2 + $0x8] sm:$0xf] %vm1822, %v1801
        %1825 = vst.msk [vmem:[#allocation2 + $0x10] sm:$0xf] %vm1822, %v1803
        %1826 = vst.msk [vmem:[#allocation2 + $0x18] sm:$0xf] %vm1822, %v1805
        %1827 = vst.msk [vmem:[#allocation2 + $0x20] sm:$0xf] %vm1822, %v1807
        %1828 = vst.msk [vmem:[#allocation2 + $0x28] sm:$0xf] %vm1822, %v1809
        %1829 = vst.msk [vmem:[#allocation2 + $0x30] sm:$0xf] %vm1822, %v1811
        %1830 = vst.msk [vmem:[#allocation2 + $0x38] sm:$0xf] %vm1822, %v1813
        %v1831 = vld [vmem:[%s1330] sm:$0xc]
        %v1832 = vld [vmem:[%s1330 + $0x4] sm:$0x3]
        %v1833 = vld [vmem:[%s1330 + $0x8] sm:$0xc]
        %v1834 = vld [vmem:[%s1330 + $0xc] sm:$0x3]
        %v1835 = vld [vmem:[%s1330 + $0x10] sm:$0xc]
        %v1836 = vld [vmem:[%s1330 + $0x14] sm:$0x3]
        %v1837 = vld [vmem:[%s1330 + $0x18] sm:$0xc]
        %v1838 = vld [vmem:[%s1330 + $0x1c] sm:$0x3]
        %v1839 = vld [vmem:[%s1330 + $0x20] sm:$0xc]
        %v1840 = vld [vmem:[%s1330 + $0x24] sm:$0x3]
        %v1841 = vld [vmem:[%s1330 + $0x28] sm:$0xc]
        %v1842 = vld [vmem:[%s1330 + $0x2c] sm:$0x3]
        %v1843 = vld [vmem:[%s1330 + $0x30] sm:$0xc]
        %v1844 = vld [vmem:[%s1330 + $0x34] sm:$0x3]
        %v1845 = vld [vmem:[%s1330 + $0x38] sm:$0xc]
        %v1846 = vld [vmem:[%s1330 + $0x3c] sm:$0x3]
        %v1863 = vrot.slane %v1831, 6
        %v1864 = vrot.slane %v1863, 4
        %v1865 = vrot.slane %v1832, 6
        %v1866 = vsel %vm666, %v1864, %v1865
        %v1867 = vrot.slane %v1833, 6
        %v1868 = vrot.slane %v1867, 4
        %v1869 = vrot.slane %v1834, 6
        %v1870 = vsel %vm666, %v1868, %v1869
        %v1871 = vrot.slane %v1835, 6
        %v1872 = vrot.slane %v1871, 4
        %v1873 = vrot.slane %v1836, 6
        %v1874 = vsel %vm666, %v1872, %v1873
        %v1875 = vrot.slane %v1837, 6
        %v1876 = vrot.slane %v1875, 4
        %v1877 = vrot.slane %v1838, 6
        %v1878 = vsel %vm666, %v1876, %v1877
        %v1879 = vrot.slane %v1839, 6
        %v1880 = vrot.slane %v1879, 4
        %v1881 = vrot.slane %v1840, 6
        %v1882 = vsel %vm666, %v1880, %v1881
        %v1883 = vrot.slane %v1841, 6
        %v1884 = vrot.slane %v1883, 4
        %v1885 = vrot.slane %v1842, 6
        %v1886 = vsel %vm666, %v1884, %v1885
        %v1887 = vrot.slane %v1843, 6
        %v1888 = vrot.slane %v1887, 4
        %v1889 = vrot.slane %v1844, 6
        %v1890 = vsel %vm666, %v1888, %v1889
        %v1891 = vrot.slane %v1845, 6
        %v1892 = vrot.slane %v1891, 4
        %v1893 = vrot.slane %v1846, 6
        %v1894 = vsel %vm666, %v1892, %v1893
        %1895 = vrot.lane.b32.xlu0 %v1866, 112
        %v1896 = vpop.permute.xlu0 %1895
        %1897 = vrot.lane.b32.xlu0 %v1870, 112
        %v1898 = vpop.permute.xlu0 %1897
        %1899 = vrot.lane.b32.xlu0 %v1874, 112
        %v1900 = vpop.permute.xlu0 %1899
        %1901 = vrot.lane.b32.xlu0 %v1878, 112
        %v1902 = vpop.permute.xlu0 %1901
        %1903 = vrot.lane.b32.xlu0 %v1882, 112
        %v1904 = vpop.permute.xlu0 %1903
        %1905 = vrot.lane.b32.xlu0 %v1886, 112
        %v1906 = vpop.permute.xlu0 %1905
        %1907 = vrot.lane.b32.xlu0 %v1890, 112
        %v1908 = vpop.permute.xlu0 %1907
        %1909 = vrot.lane.b32.xlu0 %v1894, 112
        %v1910 = vpop.permute.xlu0 %1909
        %vm1919 = vcmask 978816
        %1920 = vst.msk [vmem:[#allocation2] sm:$0xf] %vm1919, %v1896
        %1921 = vst.msk [vmem:[#allocation2 + $0x8] sm:$0xf] %vm1919, %v1898
        %1922 = vst.msk [vmem:[#allocation2 + $0x10] sm:$0xf] %vm1919, %v1900
        %1923 = vst.msk [vmem:[#allocation2 + $0x18] sm:$0xf] %vm1919, %v1902
        %1924 = vst.msk [vmem:[#allocation2 + $0x20] sm:$0xf] %vm1919, %v1904
        %1925 = vst.msk [vmem:[#allocation2 + $0x28] sm:$0xf] %vm1919, %v1906
        %1926 = vst.msk [vmem:[#allocation2 + $0x30] sm:$0xf] %vm1919, %v1908
        %1927 = vst.msk [vmem:[#allocation2 + $0x38] sm:$0xf] %vm1919, %v1910
        %s1928 = scalar_lea.vmem %s141, 24
        %v1929 = vld [vmem:[%s1928] sm:$0xf]
        %v1930 = vld [vmem:[%s1928 + $0x8] sm:$0xf]
        %v1931 = vld [vmem:[%s1928 + $0x10] sm:$0xf]
        %v1932 = vld [vmem:[%s1928 + $0x18] sm:$0xf]
        %v1933 = vld [vmem:[%s1928 + $0x20] sm:$0xf]
        %v1934 = vld [vmem:[%s1928 + $0x28] sm:$0xf]
        %v1935 = vld [vmem:[%s1928 + $0x30] sm:$0xf]
        %v1936 = vld [vmem:[%s1928 + $0x38] sm:$0xf]
        %1945 = vrot.lane.b32.xlu0 %v1929, 120
        %v1946 = vpop.permute.xlu0 %1945
        %1947 = vrot.lane.b32.xlu0 %v1930, 120
        %v1948 = vpop.permute.xlu0 %1947
        %1949 = vrot.lane.b32.xlu0 %v1931, 120
        %v1950 = vpop.permute.xlu0 %1949
        %1951 = vrot.lane.b32.xlu0 %v1932, 120
        %v1952 = vpop.permute.xlu0 %1951
        %1953 = vrot.lane.b32.xlu0 %v1933, 120
        %v1954 = vpop.permute.xlu0 %1953
        %1955 = vrot.lane.b32.xlu0 %v1934, 120
        %v1956 = vpop.permute.xlu0 %1955
        %1957 = vrot.lane.b32.xlu0 %v1935, 120
        %v1958 = vpop.permute.xlu0 %1957
        %1959 = vrot.lane.b32.xlu0 %v1936, 120
        %v1960 = vpop.permute.xlu0 %1959
        %vm1969 = vcmask 1044416
        %1970 = vst.msk [vmem:[#allocation2] sm:$0xf] %vm1969, %v1946
        %1971 = vst.msk [vmem:[#allocation2 + $0x8] sm:$0xf] %vm1969, %v1948
        %1972 = vst.msk [vmem:[#allocation2 + $0x10] sm:$0xf] %vm1969, %v1950
        %1973 = vst.msk [vmem:[#allocation2 + $0x18] sm:$0xf] %vm1969, %v1952
        %1974 = vst.msk [vmem:[#allocation2 + $0x20] sm:$0xf] %vm1969, %v1954
        %1975 = vst.msk [vmem:[#allocation2 + $0x28] sm:$0xf] %vm1969, %v1956
        %1976 = vst.msk [vmem:[#allocation2 + $0x30] sm:$0xf] %vm1969, %v1958
        %1977 = vst.msk [vmem:[#allocation2 + $0x38] sm:$0xf] %vm1969, %v1960
        %v1978 = vld [vmem:[%s1928] sm:$0xf]
        %v1979 = vld [vmem:[%s1928 + $0x4] sm:$0x1]
        %v1980 = vld [vmem:[%s1928 + $0x8] sm:$0xf]
        %v1981 = vld [vmem:[%s1928 + $0xc] sm:$0x1]
        %v1982 = vld [vmem:[%s1928 + $0x10] sm:$0xf]
        %v1983 = vld [vmem:[%s1928 + $0x14] sm:$0x1]
        %v1984 = vld [vmem:[%s1928 + $0x18] sm:$0xf]
        %v1985 = vld [vmem:[%s1928 + $0x1c] sm:$0x1]
        %v1986 = vld [vmem:[%s1928 + $0x20] sm:$0xf]
        %v1987 = vld [vmem:[%s1928 + $0x24] sm:$0x1]
        %v1988 = vld [vmem:[%s1928 + $0x28] sm:$0xf]
        %v1989 = vld [vmem:[%s1928 + $0x2c] sm:$0x1]
        %v1990 = vld [vmem:[%s1928 + $0x30] sm:$0xf]
        %v1991 = vld [vmem:[%s1928 + $0x34] sm:$0x1]
        %v1992 = vld [vmem:[%s1928 + $0x38] sm:$0xf]
        %v1993 = vld [vmem:[%s1928 + $0x3c] sm:$0x1]
        %v1995 = vshrl.u32 %v1978, 16
        %v1997 = vrot.slane %v1995, 4
        %v1998 = vshll.u32 %v1978, 16
        %v2000 = vrot.slane %v1998, 5
        %v2001 = vor.u32 %v1997, %v2000
        %v2002 = vrot.slane %v2001, 4
        %v2004 = vshll.u32 %v1979, 16
        %v2006 = vrot.slane %v2004, 5
        %v2007 = vsel %vm190, %v2002, %v2006
        %v2009 = vshrl.u32 %v1980, 16
        %v2011 = vrot.slane %v2009, 4
        %v2012 = vshll.u32 %v1980, 16
        %v2014 = vrot.slane %v2012, 5
        %v2015 = vor.u32 %v2011, %v2014
        %v2016 = vrot.slane %v2015, 4
        %v2018 = vshll.u32 %v1981, 16
        %v2020 = vrot.slane %v2018, 5
        %v2021 = vsel %vm190, %v2016, %v2020
        %v2023 = vshrl.u32 %v1982, 16
        %v2025 = vrot.slane %v2023, 4
        %v2026 = vshll.u32 %v1982, 16
        %v2028 = vrot.slane %v2026, 5
        %v2029 = vor.u32 %v2025, %v2028
        %v2030 = vrot.slane %v2029, 4
        %v2032 = vshll.u32 %v1983, 16
        %v2034 = vrot.slane %v2032, 5
        %v2035 = vsel %vm190, %v2030, %v2034
        %v2037 = vshrl.u32 %v1984, 16
        %v2039 = vrot.slane %v2037, 4
        %v2040 = vshll.u32 %v1984, 16
        %v2042 = vrot.slane %v2040, 5
        %v2043 = vor.u32 %v2039, %v2042
        %v2044 = vrot.slane %v2043, 4
        %v2046 = vshll.u32 %v1985, 16
        %v2048 = vrot.slane %v2046, 5
        %v2049 = vsel %vm190, %v2044, %v2048
        %v2051 = vshrl.u32 %v1986, 16
        %v2053 = vrot.slane %v2051, 4
        %v2054 = vshll.u32 %v1986, 16
        %v2056 = vrot.slane %v2054, 5
        %v2057 = vor.u32 %v2053, %v2056
        %v2058 = vrot.slane %v2057, 4
        %v2060 = vshll.u32 %v1987, 16
        %v2062 = vrot.slane %v2060, 5
        %v2063 = vsel %vm190, %v2058, %v2062
        %v2065 = vshrl.u32 %v1988, 16
        %v2067 = vrot.slane %v2065, 4
        %v2068 = vshll.u32 %v1988, 16
        %v2070 = vrot.slane %v2068, 5
        %v2071 = vor.u32 %v2067, %v2070
        %v2072 = vrot.slane %v2071, 4
        %v2074 = vshll.u32 %v1989, 16
        %v2076 = vrot.slane %v2074, 5
        %v2077 = vsel %vm190, %v2072, %v2076
        %v2079 = vshrl.u32 %v1990, 16
        %v2081 = vrot.slane %v2079, 4
        %v2082 = vshll.u32 %v1990, 16
        %v2084 = vrot.slane %v2082, 5
        %v2085 = vor.u32 %v2081, %v2084
        %v2086 = vrot.slane %v2085, 4
        %v2088 = vshll.u32 %v1991, 16
        %v2090 = vrot.slane %v2088, 5
        %v2091 = vsel %vm190, %v2086, %v2090
        %v2093 = vshrl.u32 %v1992, 16
        %v2095 = vrot.slane %v2093, 4
        %v2096 = vshll.u32 %v1992, 16
        %v2098 = vrot.slane %v2096, 5
        %v2099 = vor.u32 %v2095, %v2098
        %v2100 = vrot.slane %v2099, 4
        %v2102 = vshll.u32 %v1993, 16
        %v2104 = vrot.slane %v2102, 5
        %v2105 = vsel %vm190, %v2100, %v2104
        %2114 = vst.msk [vmem:[#allocation2 + $0x4] sm:$0xf] %vm163, %v2007
        %2115 = vst.msk [vmem:[#allocation2 + $0xc] sm:$0xf] %vm163, %v2021
        %2116 = vst.msk [vmem:[#allocation2 + $0x14] sm:$0xf] %vm163, %v2035
        %2117 = vst.msk [vmem:[#allocation2 + $0x1c] sm:$0xf] %vm163, %v2049
        %2118 = vst.msk [vmem:[#allocation2 + $0x24] sm:$0xf] %vm163, %v2063
        %2119 = vst.msk [vmem:[#allocation2 + $0x2c] sm:$0xf] %vm163, %v2077
        %2120 = vst.msk [vmem:[#allocation2 + $0x34] sm:$0xf] %vm163, %v2091
        %2121 = vst.msk [vmem:[#allocation2 + $0x3c] sm:$0xf] %vm163, %v2105
        %v2122 = vld [vmem:[%s1928] sm:$0xe]
        %v2123 = vld [vmem:[%s1928 + $0x4] sm:$0x1]
        %v2124 = vld [vmem:[%s1928 + $0x8] sm:$0xe]
        %v2125 = vld [vmem:[%s1928 + $0xc] sm:$0x1]
        %v2126 = vld [vmem:[%s1928 + $0x10] sm:$0xe]
        %v2127 = vld [vmem:[%s1928 + $0x14] sm:$0x1]
        %v2128 = vld [vmem:[%s1928 + $0x18] sm:$0xe]
        %v2129 = vld [vmem:[%s1928 + $0x1c] sm:$0x1]
        %v2130 = vld [vmem:[%s1928 + $0x20] sm:$0xe]
        %v2131 = vld [vmem:[%s1928 + $0x24] sm:$0x1]
        %v2132 = vld [vmem:[%s1928 + $0x28] sm:$0xe]
        %v2133 = vld [vmem:[%s1928 + $0x2c] sm:$0x1]
        %v2134 = vld [vmem:[%s1928 + $0x30] sm:$0xe]
        %v2135 = vld [vmem:[%s1928 + $0x34] sm:$0x1]
        %v2136 = vld [vmem:[%s1928 + $0x38] sm:$0xe]
        %v2137 = vld [vmem:[%s1928 + $0x3c] sm:$0x1]
        %v2154 = vrot.slane %v2122, 5
        %v2155 = vrot.slane %v2154, 4
        %v2156 = vrot.slane %v2123, 5
        %v2157 = vsel %vm370, %v2155, %v2156
        %v2158 = vrot.slane %v2124, 5
        %v2159 = vrot.slane %v2158, 4
        %v2160 = vrot.slane %v2125, 5
        %v2161 = vsel %vm370, %v2159, %v2160
        %v2162 = vrot.slane %v2126, 5
        %v2163 = vrot.slane %v2162, 4
        %v2164 = vrot.slane %v2127, 5
        %v2165 = vsel %vm370, %v2163, %v2164
        %v2166 = vrot.slane %v2128, 5
        %v2167 = vrot.slane %v2166, 4
        %v2168 = vrot.slane %v2129, 5
        %v2169 = vsel %vm370, %v2167, %v2168
        %v2170 = vrot.slane %v2130, 5
        %v2171 = vrot.slane %v2170, 4
        %v2172 = vrot.slane %v2131, 5
        %v2173 = vsel %vm370, %v2171, %v2172
        %v2174 = vrot.slane %v2132, 5
        %v2175 = vrot.slane %v2174, 4
        %v2176 = vrot.slane %v2133, 5
        %v2177 = vsel %vm370, %v2175, %v2176
        %v2178 = vrot.slane %v2134, 5
        %v2179 = vrot.slane %v2178, 4
        %v2180 = vrot.slane %v2135, 5
        %v2181 = vsel %vm370, %v2179, %v2180
        %v2182 = vrot.slane %v2136, 5
        %v2183 = vrot.slane %v2182, 4
        %v2184 = vrot.slane %v2137, 5
        %v2185 = vsel %vm370, %v2183, %v2184
        %2186 = vrot.lane.b32.xlu0 %v2157, 8
        %v2187 = vpop.permute.xlu0 %2186
        %2188 = vrot.lane.b32.xlu0 %v2161, 8
        %v2189 = vpop.permute.xlu0 %2188
        %2190 = vrot.lane.b32.xlu0 %v2165, 8
        %v2191 = vpop.permute.xlu0 %2190
        %2192 = vrot.lane.b32.xlu0 %v2169, 8
        %v2193 = vpop.permute.xlu0 %2192
        %2194 = vrot.lane.b32.xlu0 %v2173, 8
        %v2195 = vpop.permute.xlu0 %2194
        %2196 = vrot.lane.b32.xlu0 %v2177, 8
        %v2197 = vpop.permute.xlu0 %2196
        %2198 = vrot.lane.b32.xlu0 %v2181, 8
        %v2199 = vpop.permute.xlu0 %2198
        %2200 = vrot.lane.b32.xlu0 %v2185, 8
        %v2201 = vpop.permute.xlu0 %2200
        %2210 = vst.msk [vmem:[#allocation2 + $0x4] sm:$0xf] %vm327, %v2187
        %2211 = vst.msk [vmem:[#allocation2 + $0xc] sm:$0xf] %vm327, %v2189
        %2212 = vst.msk [vmem:[#allocation2 + $0x14] sm:$0xf] %vm327, %v2191
        %2213 = vst.msk [vmem:[#allocation2 + $0x1c] sm:$0xf] %vm327, %v2193
        %2214 = vst.msk [vmem:[#allocation2 + $0x24] sm:$0xf] %vm327, %v2195
        %2215 = vst.msk [vmem:[#allocation2 + $0x2c] sm:$0xf] %vm327, %v2197
        %2216 = vst.msk [vmem:[#allocation2 + $0x34] sm:$0xf] %vm327, %v2199
        %2217 = vst.msk [vmem:[#allocation2 + $0x3c] sm:$0xf] %vm327, %v2201
        %v2218 = vld [vmem:[%s1928] sm:$0xe]
        %v2219 = vld [vmem:[%s1928 + $0x4] sm:$0x3]
        %v2220 = vld [vmem:[%s1928 + $0x8] sm:$0xe]
        %v2221 = vld [vmem:[%s1928 + $0xc] sm:$0x3]
        %v2222 = vld [vmem:[%s1928 + $0x10] sm:$0xe]
        %v2223 = vld [vmem:[%s1928 + $0x14] sm:$0x3]
        %v2224 = vld [vmem:[%s1928 + $0x18] sm:$0xe]
        %v2225 = vld [vmem:[%s1928 + $0x1c] sm:$0x3]
        %v2226 = vld [vmem:[%s1928 + $0x20] sm:$0xe]
        %v2227 = vld [vmem:[%s1928 + $0x24] sm:$0x3]
        %v2228 = vld [vmem:[%s1928 + $0x28] sm:$0xe]
        %v2229 = vld [vmem:[%s1928 + $0x2c] sm:$0x3]
        %v2230 = vld [vmem:[%s1928 + $0x30] sm:$0xe]
        %v2231 = vld [vmem:[%s1928 + $0x34] sm:$0x3]
        %v2232 = vld [vmem:[%s1928 + $0x38] sm:$0xe]
        %v2233 = vld [vmem:[%s1928 + $0x3c] sm:$0x3]
        %v2235 = vshrl.u32 %v2218, 16
        %v2237 = vrot.slane %v2235, 5
        %v2238 = vshll.u32 %v2218, 16
        %v2240 = vrot.slane %v2238, 6
        %v2241 = vor.u32 %v2237, %v2240
        %v2242 = vrot.slane %v2241, 4
        %v2244 = vshrl.u32 %v2219, 16
        %v2246 = vrot.slane %v2244, 5
        %v2247 = vshll.u32 %v2219, 16
        %v2249 = vrot.slane %v2247, 6
        %v2250 = vor.u32 %v2246, %v2249
        %v2251 = vsel %vm454, %v2242, %v2250
        %v2253 = vshrl.u32 %v2220, 16
        %v2255 = vrot.slane %v2253, 5
        %v2256 = vshll.u32 %v2220, 16
        %v2258 = vrot.slane %v2256, 6
        %v2259 = vor.u32 %v2255, %v2258
        %v2260 = vrot.slane %v2259, 4
        %v2262 = vshrl.u32 %v2221, 16
        %v2264 = vrot.slane %v2262, 5
        %v2265 = vshll.u32 %v2221, 16
        %v2267 = vrot.slane %v2265, 6
        %v2268 = vor.u32 %v2264, %v2267
        %v2269 = vsel %vm454, %v2260, %v2268
        %v2271 = vshrl.u32 %v2222, 16
        %v2273 = vrot.slane %v2271, 5
        %v2274 = vshll.u32 %v2222, 16
        %v2276 = vrot.slane %v2274, 6
        %v2277 = vor.u32 %v2273, %v2276
        %v2278 = vrot.slane %v2277, 4
        %v2280 = vshrl.u32 %v2223, 16
        %v2282 = vrot.slane %v2280, 5
        %v2283 = vshll.u32 %v2223, 16
        %v2285 = vrot.slane %v2283, 6
        %v2286 = vor.u32 %v2282, %v2285
        %v2287 = vsel %vm454, %v2278, %v2286
        %v2289 = vshrl.u32 %v2224, 16
        %v2291 = vrot.slane %v2289, 5
        %v2292 = vshll.u32 %v2224, 16
        %v2294 = vrot.slane %v2292, 6
        %v2295 = vor.u32 %v2291, %v2294
        %v2296 = vrot.slane %v2295, 4
        %v2298 = vshrl.u32 %v2225, 16
        %v2300 = vrot.slane %v2298, 5
        %v2301 = vshll.u32 %v2225, 16
        %v2303 = vrot.slane %v2301, 6
        %v2304 = vor.u32 %v2300, %v2303
        %v2305 = vsel %vm454, %v2296, %v2304
        %v2307 = vshrl.u32 %v2226, 16
        %v2309 = vrot.slane %v2307, 5
        %v2310 = vshll.u32 %v2226, 16
        %v2312 = vrot.slane %v2310, 6
        %v2313 = vor.u32 %v2309, %v2312
        %v2314 = vrot.slane %v2313, 4
        %v2316 = vshrl.u32 %v2227, 16
        %v2318 = vrot.slane %v2316, 5
        %v2319 = vshll.u32 %v2227, 16
        %v2321 = vrot.slane %v2319, 6
        %v2322 = vor.u32 %v2318, %v2321
        %v2323 = vsel %vm454, %v2314, %v2322
        %v2325 = vshrl.u32 %v2228, 16
        %v2327 = vrot.slane %v2325, 5
        %v2328 = vshll.u32 %v2228, 16
        %v2330 = vrot.slane %v2328, 6
        %v2331 = vor.u32 %v2327, %v2330
        %v2332 = vrot.slane %v2331, 4
        %v2334 = vshrl.u32 %v2229, 16
        %v2336 = vrot.slane %v2334, 5
        %v2337 = vshll.u32 %v2229, 16
        %v2339 = vrot.slane %v2337, 6
        %v2340 = vor.u32 %v2336, %v2339
        %v2341 = vsel %vm454, %v2332, %v2340
        %v2343 = vshrl.u32 %v2230, 16
        %v2345 = vrot.slane %v2343, 5
        %v2346 = vshll.u32 %v2230, 16
        %v2348 = vrot.slane %v2346, 6
        %v2349 = vor.u32 %v2345, %v2348
        %v2350 = vrot.slane %v2349, 4
        %v2352 = vshrl.u32 %v2231, 16
        %v2354 = vrot.slane %v2352, 5
        %v2355 = vshll.u32 %v2231, 16
        %v2357 = vrot.slane %v2355, 6
        %v2358 = vor.u32 %v2354, %v2357
        %v2359 = vsel %vm454, %v2350, %v2358
        %v2361 = vshrl.u32 %v2232, 16
        %v2363 = vrot.slane %v2361, 5
        %v2364 = vshll.u32 %v2232, 16
        %v2366 = vrot.slane %v2364, 6
        %v2367 = vor.u32 %v2363, %v2366
        %v2368 = vrot.slane %v2367, 4
        %v2370 = vshrl.u32 %v2233, 16
        %v2372 = vrot.slane %v2370, 5
        %v2373 = vshll.u32 %v2233, 16
        %v2375 = vrot.slane %v2373, 6
        %v2376 = vor.u32 %v2372, %v2375
        %v2377 = vsel %vm454, %v2368, %v2376
        %2378 = vrot.lane.b32.xlu0 %v2251, 16
        %v2379 = vpop.permute.xlu0 %2378
        %2380 = vrot.lane.b32.xlu0 %v2269, 16
        %v2381 = vpop.permute.xlu0 %2380
        %2382 = vrot.lane.b32.xlu0 %v2287, 16
        %v2383 = vpop.permute.xlu0 %2382
        %2384 = vrot.lane.b32.xlu0 %v2305, 16
        %v2385 = vpop.permute.xlu0 %2384
        %2386 = vrot.lane.b32.xlu0 %v2323, 16
        %v2387 = vpop.permute.xlu0 %2386
        %2388 = vrot.lane.b32.xlu0 %v2341, 16
        %v2389 = vpop.permute.xlu0 %2388
        %2390 = vrot.lane.b32.xlu0 %v2359, 16
        %v2391 = vpop.permute.xlu0 %2390
        %2392 = vrot.lane.b32.xlu0 %v2377, 16
        %v2393 = vpop.permute.xlu0 %2392
        %2402 = vst.msk [vmem:[#allocation2 + $0x4] sm:$0xf] %vm427, %v2379
        %2403 = vst.msk [vmem:[#allocation2 + $0xc] sm:$0xf] %vm427, %v2381
        %2404 = vst.msk [vmem:[#allocation2 + $0x14] sm:$0xf] %vm427, %v2383
        %2405 = vst.msk [vmem:[#allocation2 + $0x1c] sm:$0xf] %vm427, %v2385
        %2406 = vst.msk [vmem:[#allocation2 + $0x24] sm:$0xf] %vm427, %v2387
        %2407 = vst.msk [vmem:[#allocation2 + $0x2c] sm:$0xf] %vm427, %v2389
        %2408 = vst.msk [vmem:[#allocation2 + $0x34] sm:$0xf] %vm427, %v2391
        %2409 = vst.msk [vmem:[#allocation2 + $0x3c] sm:$0xf] %vm427, %v2393
        %v2410 = vld [vmem:[%s1928] sm:$0xc]
        %v2411 = vld [vmem:[%s1928 + $0x4] sm:$0x3]
        %v2412 = vld [vmem:[%s1928 + $0x8] sm:$0xc]
        %v2413 = vld [vmem:[%s1928 + $0xc] sm:$0x3]
        %v2414 = vld [vmem:[%s1928 + $0x10] sm:$0xc]
        %v2415 = vld [vmem:[%s1928 + $0x14] sm:$0x3]
        %v2416 = vld [vmem:[%s1928 + $0x18] sm:$0xc]
        %v2417 = vld [vmem:[%s1928 + $0x1c] sm:$0x3]
        %v2418 = vld [vmem:[%s1928 + $0x20] sm:$0xc]
        %v2419 = vld [vmem:[%s1928 + $0x24] sm:$0x3]
        %v2420 = vld [vmem:[%s1928 + $0x28] sm:$0xc]
        %v2421 = vld [vmem:[%s1928 + $0x2c] sm:$0x3]
        %v2422 = vld [vmem:[%s1928 + $0x30] sm:$0xc]
        %v2423 = vld [vmem:[%s1928 + $0x34] sm:$0x3]
        %v2424 = vld [vmem:[%s1928 + $0x38] sm:$0xc]
        %v2425 = vld [vmem:[%s1928 + $0x3c] sm:$0x3]
        %v2442 = vrot.slane %v2410, 6
        %v2443 = vrot.slane %v2442, 4
        %v2444 = vrot.slane %v2411, 6
        %v2445 = vsel %vm666, %v2443, %v2444
        %v2446 = vrot.slane %v2412, 6
        %v2447 = vrot.slane %v2446, 4
        %v2448 = vrot.slane %v2413, 6
        %v2449 = vsel %vm666, %v2447, %v2448
        %v2450 = vrot.slane %v2414, 6
        %v2451 = vrot.slane %v2450, 4
        %v2452 = vrot.slane %v2415, 6
        %v2453 = vsel %vm666, %v2451, %v2452
        %v2454 = vrot.slane %v2416, 6
        %v2455 = vrot.slane %v2454, 4
        %v2456 = vrot.slane %v2417, 6
        %v2457 = vsel %vm666, %v2455, %v2456
        %v2458 = vrot.slane %v2418, 6
        %v2459 = vrot.slane %v2458, 4
        %v2460 = vrot.slane %v2419, 6
        %v2461 = vsel %vm666, %v2459, %v2460
        %v2462 = vrot.slane %v2420, 6
        %v2463 = vrot.slane %v2462, 4
        %v2464 = vrot.slane %v2421, 6
        %v2465 = vsel %vm666, %v2463, %v2464
        %v2466 = vrot.slane %v2422, 6
        %v2467 = vrot.slane %v2466, 4
        %v2468 = vrot.slane %v2423, 6
        %v2469 = vsel %vm666, %v2467, %v2468
        %v2470 = vrot.slane %v2424, 6
        %v2471 = vrot.slane %v2470, 4
        %v2472 = vrot.slane %v2425, 6
        %v2473 = vsel %vm666, %v2471, %v2472
        %2474 = vrot.lane.b32.xlu0 %v2445, 24
        %v2475 = vpop.permute.xlu0 %2474
        %2476 = vrot.lane.b32.xlu0 %v2449, 24
        %v2477 = vpop.permute.xlu0 %2476
        %2478 = vrot.lane.b32.xlu0 %v2453, 24
        %v2479 = vpop.permute.xlu0 %2478
        %2480 = vrot.lane.b32.xlu0 %v2457, 24
        %v2481 = vpop.permute.xlu0 %2480
        %2482 = vrot.lane.b32.xlu0 %v2461, 24
        %v2483 = vpop.permute.xlu0 %2482
        %2484 = vrot.lane.b32.xlu0 %v2465, 24
        %v2485 = vpop.permute.xlu0 %2484
        %2486 = vrot.lane.b32.xlu0 %v2469, 24
        %v2487 = vpop.permute.xlu0 %2486
        %2488 = vrot.lane.b32.xlu0 %v2473, 24
        %v2489 = vpop.permute.xlu0 %2488
        %2498 = vst.msk [vmem:[#allocation2 + $0x4] sm:$0xf] %vm623, %v2475
        %2499 = vst.msk [vmem:[#allocation2 + $0xc] sm:$0xf] %vm623, %v2477
        %2500 = vst.msk [vmem:[#allocation2 + $0x14] sm:$0xf] %vm623, %v2479
        %2501 = vst.msk [vmem:[#allocation2 + $0x1c] sm:$0xf] %vm623, %v2481
        %2502 = vst.msk [vmem:[#allocation2 + $0x24] sm:$0xf] %vm623, %v2483
        %2503 = vst.msk [vmem:[#allocation2 + $0x2c] sm:$0xf] %vm623, %v2485
        %2504 = vst.msk [vmem:[#allocation2 + $0x34] sm:$0xf] %vm623, %v2487
        %2505 = vst.msk [vmem:[#allocation2 + $0x3c] sm:$0xf] %vm623, %v2489
        %s2506 = scalar_lea.vmem %s141, 32
        %v2507 = vld [vmem:[%s2506] sm:$0xf]
        %v2508 = vld [vmem:[%s2506 + $0x8] sm:$0xf]
        %v2509 = vld [vmem:[%s2506 + $0x10] sm:$0xf]
        %v2510 = vld [vmem:[%s2506 + $0x18] sm:$0xf]
        %v2511 = vld [vmem:[%s2506 + $0x20] sm:$0xf]
        %v2512 = vld [vmem:[%s2506 + $0x28] sm:$0xf]
        %v2513 = vld [vmem:[%s2506 + $0x30] sm:$0xf]
        %v2514 = vld [vmem:[%s2506 + $0x38] sm:$0xf]
        %2523 = vrot.lane.b32.xlu0 %v2507, 32
        %v2524 = vpop.permute.xlu0 %2523
        %2525 = vrot.lane.b32.xlu0 %v2508, 32
        %v2526 = vpop.permute.xlu0 %2525
        %2527 = vrot.lane.b32.xlu0 %v2509, 32
        %v2528 = vpop.permute.xlu0 %2527
        %2529 = vrot.lane.b32.xlu0 %v2510, 32
        %v2530 = vpop.permute.xlu0 %2529
        %2531 = vrot.lane.b32.xlu0 %v2511, 32
        %v2532 = vpop.permute.xlu0 %2531
        %2533 = vrot.lane.b32.xlu0 %v2512, 32
        %v2534 = vpop.permute.xlu0 %2533
        %2535 = vrot.lane.b32.xlu0 %v2513, 32
        %v2536 = vpop.permute.xlu0 %2535
        %2537 = vrot.lane.b32.xlu0 %v2514, 32
        %v2538 = vpop.permute.xlu0 %2537
        %2547 = vst.msk [vmem:[#allocation2 + $0x4] sm:$0xf] %vm723, %v2524
        %2548 = vst.msk [vmem:[#allocation2 + $0xc] sm:$0xf] %vm723, %v2526
        %2549 = vst.msk [vmem:[#allocation2 + $0x14] sm:$0xf] %vm723, %v2528
        %2550 = vst.msk [vmem:[#allocation2 + $0x1c] sm:$0xf] %vm723, %v2530
        %2551 = vst.msk [vmem:[#allocation2 + $0x24] sm:$0xf] %vm723, %v2532
        %2552 = vst.msk [vmem:[#allocation2 + $0x2c] sm:$0xf] %vm723, %v2534
        %2553 = vst.msk [vmem:[#allocation2 + $0x34] sm:$0xf] %vm723, %v2536
        %2554 = vst.msk [vmem:[#allocation2 + $0x3c] sm:$0xf] %vm723, %v2538
        %v2555 = vld [vmem:[%s2506] sm:$0xf]
        %v2556 = vld [vmem:[%s2506 + $0x4] sm:$0x1]
        %v2557 = vld [vmem:[%s2506 + $0x8] sm:$0xf]
        %v2558 = vld [vmem:[%s2506 + $0xc] sm:$0x1]
        %v2559 = vld [vmem:[%s2506 + $0x10] sm:$0xf]
        %v2560 = vld [vmem:[%s2506 + $0x14] sm:$0x1]
        %v2561 = vld [vmem:[%s2506 + $0x18] sm:$0xf]
        %v2562 = vld [vmem:[%s2506 + $0x1c] sm:$0x1]
        %v2563 = vld [vmem:[%s2506 + $0x20] sm:$0xf]
        %v2564 = vld [vmem:[%s2506 + $0x24] sm:$0x1]
        %v2565 = vld [vmem:[%s2506 + $0x28] sm:$0xf]
        %v2566 = vld [vmem:[%s2506 + $0x2c] sm:$0x1]
        %v2567 = vld [vmem:[%s2506 + $0x30] sm:$0xf]
        %v2568 = vld [vmem:[%s2506 + $0x34] sm:$0x1]
        %v2569 = vld [vmem:[%s2506 + $0x38] sm:$0xf]
        %v2570 = vld [vmem:[%s2506 + $0x3c] sm:$0x1]
        %v2572 = vshrl.u32 %v2555, 16
        %v2574 = vrot.slane %v2572, 4
        %v2575 = vshll.u32 %v2555, 16
        %v2577 = vrot.slane %v2575, 5
        %v2578 = vor.u32 %v2574, %v2577
        %v2579 = vrot.slane %v2578, 4
        %v2581 = vshll.u32 %v2556, 16
        %v2583 = vrot.slane %v2581, 5
        %v2584 = vsel %vm190, %v2579, %v2583
        %v2586 = vshrl.u32 %v2557, 16
        %v2588 = vrot.slane %v2586, 4
        %v2589 = vshll.u32 %v2557, 16
        %v2591 = vrot.slane %v2589, 5
        %v2592 = vor.u32 %v2588, %v2591
        %v2593 = vrot.slane %v2592, 4
        %v2595 = vshll.u32 %v2558, 16
        %v2597 = vrot.slane %v2595, 5
        %v2598 = vsel %vm190, %v2593, %v2597
        %v2600 = vshrl.u32 %v2559, 16
        %v2602 = vrot.slane %v2600, 4
        %v2603 = vshll.u32 %v2559, 16
        %v2605 = vrot.slane %v2603, 5
        %v2606 = vor.u32 %v2602, %v2605
        %v2607 = vrot.slane %v2606, 4
        %v2609 = vshll.u32 %v2560, 16
        %v2611 = vrot.slane %v2609, 5
        %v2612 = vsel %vm190, %v2607, %v2611
        %v2614 = vshrl.u32 %v2561, 16
        %v2616 = vrot.slane %v2614, 4
        %v2617 = vshll.u32 %v2561, 16
        %v2619 = vrot.slane %v2617, 5
        %v2620 = vor.u32 %v2616, %v2619
        %v2621 = vrot.slane %v2620, 4
        %v2623 = vshll.u32 %v2562, 16
        %v2625 = vrot.slane %v2623, 5
        %v2626 = vsel %vm190, %v2621, %v2625
        %v2628 = vshrl.u32 %v2563, 16
        %v2630 = vrot.slane %v2628, 4
        %v2631 = vshll.u32 %v2563, 16
        %v2633 = vrot.slane %v2631, 5
        %v2634 = vor.u32 %v2630, %v2633
        %v2635 = vrot.slane %v2634, 4
        %v2637 = vshll.u32 %v2564, 16
        %v2639 = vrot.slane %v2637, 5
        %v2640 = vsel %vm190, %v2635, %v2639
        %v2642 = vshrl.u32 %v2565, 16
        %v2644 = vrot.slane %v2642, 4
        %v2645 = vshll.u32 %v2565, 16
        %v2647 = vrot.slane %v2645, 5
        %v2648 = vor.u32 %v2644, %v2647
        %v2649 = vrot.slane %v2648, 4
        %v2651 = vshll.u32 %v2566, 16
        %v2653 = vrot.slane %v2651, 5
        %v2654 = vsel %vm190, %v2649, %v2653
        %v2656 = vshrl.u32 %v2567, 16
        %v2658 = vrot.slane %v2656, 4
        %v2659 = vshll.u32 %v2567, 16
        %v2661 = vrot.slane %v2659, 5
        %v2662 = vor.u32 %v2658, %v2661
        %v2663 = vrot.slane %v2662, 4
        %v2665 = vshll.u32 %v2568, 16
        %v2667 = vrot.slane %v2665, 5
        %v2668 = vsel %vm190, %v2663, %v2667
        %v2670 = vshrl.u32 %v2569, 16
        %v2672 = vrot.slane %v2670, 4
        %v2673 = vshll.u32 %v2569, 16
        %v2675 = vrot.slane %v2673, 5
        %v2676 = vor.u32 %v2672, %v2675
        %v2677 = vrot.slane %v2676, 4
        %v2679 = vshll.u32 %v2570, 16
        %v2681 = vrot.slane %v2679, 5
        %v2682 = vsel %vm190, %v2677, %v2681
        %2683 = vrot.lane.b32.xlu0 %v2584, 40
        %v2684 = vpop.permute.xlu0 %2683
        %2685 = vrot.lane.b32.xlu0 %v2598, 40
        %v2686 = vpop.permute.xlu0 %2685
        %2687 = vrot.lane.b32.xlu0 %v2612, 40
        %v2688 = vpop.permute.xlu0 %2687
        %2689 = vrot.lane.b32.xlu0 %v2626, 40
        %v2690 = vpop.permute.xlu0 %2689
        %2691 = vrot.lane.b32.xlu0 %v2640, 40
        %v2692 = vpop.permute.xlu0 %2691
        %2693 = vrot.lane.b32.xlu0 %v2654, 40
        %v2694 = vpop.permute.xlu0 %2693
        %2695 = vrot.lane.b32.xlu0 %v2668, 40
        %v2696 = vpop.permute.xlu0 %2695
        %2697 = vrot.lane.b32.xlu0 %v2682, 40
        %v2698 = vpop.permute.xlu0 %2697
        %2707 = vst.msk [vmem:[#allocation2 + $0x4] sm:$0xf] %vm773, %v2684
        %2708 = vst.msk [vmem:[#allocation2 + $0xc] sm:$0xf] %vm773, %v2686
        %2709 = vst.msk [vmem:[#allocation2 + $0x14] sm:$0xf] %vm773, %v2688
        %2710 = vst.msk [vmem:[#allocation2 + $0x1c] sm:$0xf] %vm773, %v2690
        %2711 = vst.msk [vmem:[#allocation2 + $0x24] sm:$0xf] %vm773, %v2692
        %2712 = vst.msk [vmem:[#allocation2 + $0x2c] sm:$0xf] %vm773, %v2694
        %2713 = vst.msk [vmem:[#allocation2 + $0x34] sm:$0xf] %vm773, %v2696
        %2714 = vst.msk [vmem:[#allocation2 + $0x3c] sm:$0xf] %vm773, %v2698
        %v2715 = vld [vmem:[%s2506] sm:$0xe]
        %v2716 = vld [vmem:[%s2506 + $0x4] sm:$0x1]
        %v2717 = vld [vmem:[%s2506 + $0x8] sm:$0xe]
        %v2718 = vld [vmem:[%s2506 + $0xc] sm:$0x1]
        %v2719 = vld [vmem:[%s2506 + $0x10] sm:$0xe]
        %v2720 = vld [vmem:[%s2506 + $0x14] sm:$0x1]
        %v2721 = vld [vmem:[%s2506 + $0x18] sm:$0xe]
        %v2722 = vld [vmem:[%s2506 + $0x1c] sm:$0x1]
        %v2723 = vld [vmem:[%s2506 + $0x20] sm:$0xe]
        %v2724 = vld [vmem:[%s2506 + $0x24] sm:$0x1]
        %v2725 = vld [vmem:[%s2506 + $0x28] sm:$0xe]
        %v2726 = vld [vmem:[%s2506 + $0x2c] sm:$0x1]
        %v2727 = vld [vmem:[%s2506 + $0x30] sm:$0xe]
        %v2728 = vld [vmem:[%s2506 + $0x34] sm:$0x1]
        %v2729 = vld [vmem:[%s2506 + $0x38] sm:$0xe]
        %v2730 = vld [vmem:[%s2506 + $0x3c] sm:$0x1]
        %v2747 = vrot.slane %v2715, 5
        %v2748 = vrot.slane %v2747, 4
        %v2749 = vrot.slane %v2716, 5
        %v2750 = vsel %vm370, %v2748, %v2749
        %v2751 = vrot.slane %v2717, 5
        %v2752 = vrot.slane %v2751, 4
        %v2753 = vrot.slane %v2718, 5
        %v2754 = vsel %vm370, %v2752, %v2753
        %v2755 = vrot.slane %v2719, 5
        %v2756 = vrot.slane %v2755, 4
        %v2757 = vrot.slane %v2720, 5
        %v2758 = vsel %vm370, %v2756, %v2757
        %v2759 = vrot.slane %v2721, 5
        %v2760 = vrot.slane %v2759, 4
        %v2761 = vrot.slane %v2722, 5
        %v2762 = vsel %vm370, %v2760, %v2761
        %v2763 = vrot.slane %v2723, 5
        %v2764 = vrot.slane %v2763, 4
        %v2765 = vrot.slane %v2724, 5
        %v2766 = vsel %vm370, %v2764, %v2765
        %v2767 = vrot.slane %v2725, 5
        %v2768 = vrot.slane %v2767, 4
        %v2769 = vrot.slane %v2726, 5
        %v2770 = vsel %vm370, %v2768, %v2769
        %v2771 = vrot.slane %v2727, 5
        %v2772 = vrot.slane %v2771, 4
        %v2773 = vrot.slane %v2728, 5
        %v2774 = vsel %vm370, %v2772, %v2773
        %v2775 = vrot.slane %v2729, 5
        %v2776 = vrot.slane %v2775, 4
        %v2777 = vrot.slane %v2730, 5
        %v2778 = vsel %vm370, %v2776, %v2777
        %2779 = vrot.lane.b32.xlu0 %v2750, 48
        %v2780 = vpop.permute.xlu0 %2779
        %2781 = vrot.lane.b32.xlu0 %v2754, 48
        %v2782 = vpop.permute.xlu0 %2781
        %2783 = vrot.lane.b32.xlu0 %v2758, 48
        %v2784 = vpop.permute.xlu0 %2783
        %2785 = vrot.lane.b32.xlu0 %v2762, 48
        %v2786 = vpop.permute.xlu0 %2785
        %2787 = vrot.lane.b32.xlu0 %v2766, 48
        %v2788 = vpop.permute.xlu0 %2787
        %2789 = vrot.lane.b32.xlu0 %v2770, 48
        %v2790 = vpop.permute.xlu0 %2789
        %2791 = vrot.lane.b32.xlu0 %v2774, 48
        %v2792 = vpop.permute.xlu0 %2791
        %2793 = vrot.lane.b32.xlu0 %v2778, 48
        %v2794 = vpop.permute.xlu0 %2793
        %2803 = vst.msk [vmem:[#allocation2 + $0x4] sm:$0xf] %vm934, %v2780
        %2804 = vst.msk [vmem:[#allocation2 + $0xc] sm:$0xf] %vm934, %v2782
        %2805 = vst.msk [vmem:[#allocation2 + $0x14] sm:$0xf] %vm934, %v2784
        %2806 = vst.msk [vmem:[#allocation2 + $0x1c] sm:$0xf] %vm934, %v2786
        %2807 = vst.msk [vmem:[#allocation2 + $0x24] sm:$0xf] %vm934, %v2788
        %2808 = vst.msk [vmem:[#allocation2 + $0x2c] sm:$0xf] %vm934, %v2790
        %2809 = vst.msk [vmem:[#allocation2 + $0x34] sm:$0xf] %vm934, %v2792
        %2810 = vst.msk [vmem:[#allocation2 + $0x3c] sm:$0xf] %vm934, %v2794
        %v2811 = vld [vmem:[%s2506] sm:$0xe]
        %v2812 = vld [vmem:[%s2506 + $0x4] sm:$0x3]
        %v2813 = vld [vmem:[%s2506 + $0x8] sm:$0xe]
        %v2814 = vld [vmem:[%s2506 + $0xc] sm:$0x3]
        %v2815 = vld [vmem:[%s2506 + $0x10] sm:$0xe]
        %v2816 = vld [vmem:[%s2506 + $0x14] sm:$0x3]
        %v2817 = vld [vmem:[%s2506 + $0x18] sm:$0xe]
        %v2818 = vld [vmem:[%s2506 + $0x1c] sm:$0x3]
        %v2819 = vld [vmem:[%s2506 + $0x20] sm:$0xe]
        %v2820 = vld [vmem:[%s2506 + $0x24] sm:$0x3]
        %v2821 = vld [vmem:[%s2506 + $0x28] sm:$0xe]
        %v2822 = vld [vmem:[%s2506 + $0x2c] sm:$0x3]
        %v2823 = vld [vmem:[%s2506 + $0x30] sm:$0xe]
        %v2824 = vld [vmem:[%s2506 + $0x34] sm:$0x3]
        %v2825 = vld [vmem:[%s2506 + $0x38] sm:$0xe]
        %v2826 = vld [vmem:[%s2506 + $0x3c] sm:$0x3]
        %v2828 = vshrl.u32 %v2811, 16
        %v2830 = vrot.slane %v2828, 5
        %v2831 = vshll.u32 %v2811, 16
        %v2833 = vrot.slane %v2831, 6
        %v2834 = vor.u32 %v2830, %v2833
        %v2835 = vrot.slane %v2834, 4
        %v2837 = vshrl.u32 %v2812, 16
        %v2839 = vrot.slane %v2837, 5
        %v2840 = vshll.u32 %v2812, 16
        %v2842 = vrot.slane %v2840, 6
        %v2843 = vor.u32 %v2839, %v2842
        %v2844 = vsel %vm454, %v2835, %v2843
        %v2846 = vshrl.u32 %v2813, 16
        %v2848 = vrot.slane %v2846, 5
        %v2849 = vshll.u32 %v2813, 16
        %v2851 = vrot.slane %v2849, 6
        %v2852 = vor.u32 %v2848, %v2851
        %v2853 = vrot.slane %v2852, 4
        %v2855 = vshrl.u32 %v2814, 16
        %v2857 = vrot.slane %v2855, 5
        %v2858 = vshll.u32 %v2814, 16
        %v2860 = vrot.slane %v2858, 6
        %v2861 = vor.u32 %v2857, %v2860
        %v2862 = vsel %vm454, %v2853, %v2861
        %v2864 = vshrl.u32 %v2815, 16
        %v2866 = vrot.slane %v2864, 5
        %v2867 = vshll.u32 %v2815, 16
        %v2869 = vrot.slane %v2867, 6
        %v2870 = vor.u32 %v2866, %v2869
        %v2871 = vrot.slane %v2870, 4
        %v2873 = vshrl.u32 %v2816, 16
        %v2875 = vrot.slane %v2873, 5
        %v2876 = vshll.u32 %v2816, 16
        %v2878 = vrot.slane %v2876, 6
        %v2879 = vor.u32 %v2875, %v2878
        %v2880 = vsel %vm454, %v2871, %v2879
        %v2882 = vshrl.u32 %v2817, 16
        %v2884 = vrot.slane %v2882, 5
        %v2885 = vshll.u32 %v2817, 16
        %v2887 = vrot.slane %v2885, 6
        %v2888 = vor.u32 %v2884, %v2887
        %v2889 = vrot.slane %v2888, 4
        %v2891 = vshrl.u32 %v2818, 16
        %v2893 = vrot.slane %v2891, 5
        %v2894 = vshll.u32 %v2818, 16
        %v2896 = vrot.slane %v2894, 6
        %v2897 = vor.u32 %v2893, %v2896
        %v2898 = vsel %vm454, %v2889, %v2897
        %v2900 = vshrl.u32 %v2819, 16
        %v2902 = vrot.slane %v2900, 5
        %v2903 = vshll.u32 %v2819, 16
        %v2905 = vrot.slane %v2903, 6
        %v2906 = vor.u32 %v2902, %v2905
        %v2907 = vrot.slane %v2906, 4
        %v2909 = vshrl.u32 %v2820, 16
        %v2911 = vrot.slane %v2909, 5
        %v2912 = vshll.u32 %v2820, 16
        %v2914 = vrot.slane %v2912, 6
        %v2915 = vor.u32 %v2911, %v2914
        %v2916 = vsel %vm454, %v2907, %v2915
        %v2918 = vshrl.u32 %v2821, 16
        %v2920 = vrot.slane %v2918, 5
        %v2921 = vshll.u32 %v2821, 16
        %v2923 = vrot.slane %v2921, 6
        %v2924 = vor.u32 %v2920, %v2923
        %v2925 = vrot.slane %v2924, 4
        %v2927 = vshrl.u32 %v2822, 16
        %v2929 = vrot.slane %v2927, 5
        %v2930 = vshll.u32 %v2822, 16
        %v2932 = vrot.slane %v2930, 6
        %v2933 = vor.u32 %v2929, %v2932
        %v2934 = vsel %vm454, %v2925, %v2933
        %v2936 = vshrl.u32 %v2823, 16
        %v2938 = vrot.slane %v2936, 5
        %v2939 = vshll.u32 %v2823, 16
        %v2941 = vrot.slane %v2939, 6
        %v2942 = vor.u32 %v2938, %v2941
        %v2943 = vrot.slane %v2942, 4
        %v2945 = vshrl.u32 %v2824, 16
        %v2947 = vrot.slane %v2945, 5
        %v2948 = vshll.u32 %v2824, 16
        %v2950 = vrot.slane %v2948, 6
        %v2951 = vor.u32 %v2947, %v2950
        %v2952 = vsel %vm454, %v2943, %v2951
        %v2954 = vshrl.u32 %v2825, 16
        %v2956 = vrot.slane %v2954, 5
        %v2957 = vshll.u32 %v2825, 16
        %v2959 = vrot.slane %v2957, 6
        %v2960 = vor.u32 %v2956, %v2959
        %v2961 = vrot.slane %v2960, 4
        %v2963 = vshrl.u32 %v2826, 16
        %v2965 = vrot.slane %v2963, 5
        %v2966 = vshll.u32 %v2826, 16
        %v2968 = vrot.slane %v2966, 6
        %v2969 = vor.u32 %v2965, %v2968
        %v2970 = vsel %vm454, %v2961, %v2969
        %2971 = vrot.lane.b32.xlu0 %v2844, 56
        %v2972 = vpop.permute.xlu0 %2971
        %2973 = vrot.lane.b32.xlu0 %v2862, 56
        %v2974 = vpop.permute.xlu0 %2973
        %2975 = vrot.lane.b32.xlu0 %v2880, 56
        %v2976 = vpop.permute.xlu0 %2975
        %2977 = vrot.lane.b32.xlu0 %v2898, 56
        %v2978 = vpop.permute.xlu0 %2977
        %2979 = vrot.lane.b32.xlu0 %v2916, 56
        %v2980 = vpop.permute.xlu0 %2979
        %2981 = vrot.lane.b32.xlu0 %v2934, 56
        %v2982 = vpop.permute.xlu0 %2981
        %2983 = vrot.lane.b32.xlu0 %v2952, 56
        %v2984 = vpop.permute.xlu0 %2983
        %2985 = vrot.lane.b32.xlu0 %v2970, 56
        %v2986 = vpop.permute.xlu0 %2985
        %2995 = vst.msk [vmem:[#allocation2 + $0x4] sm:$0xf] %vm1031, %v2972
        %2996 = vst.msk [vmem:[#allocation2 + $0xc] sm:$0xf] %vm1031, %v2974
        %2997 = vst.msk [vmem:[#allocation2 + $0x14] sm:$0xf] %vm1031, %v2976
        %2998 = vst.msk [vmem:[#allocation2 + $0x1c] sm:$0xf] %vm1031, %v2978
        %2999 = vst.msk [vmem:[#allocation2 + $0x24] sm:$0xf] %vm1031, %v2980
        %3000 = vst.msk [vmem:[#allocation2 + $0x2c] sm:$0xf] %vm1031, %v2982
        %3001 = vst.msk [vmem:[#allocation2 + $0x34] sm:$0xf] %vm1031, %v2984
        %3002 = vst.msk [vmem:[#allocation2 + $0x3c] sm:$0xf] %vm1031, %v2986
        %v3003 = vld [vmem:[%s2506] sm:$0xc]
        %v3004 = vld [vmem:[%s2506 + $0x4] sm:$0x3]
        %v3005 = vld [vmem:[%s2506 + $0x8] sm:$0xc]
        %v3006 = vld [vmem:[%s2506 + $0xc] sm:$0x3]
        %v3007 = vld [vmem:[%s2506 + $0x10] sm:$0xc]
        %v3008 = vld [vmem:[%s2506 + $0x14] sm:$0x3]
        %v3009 = vld [vmem:[%s2506 + $0x18] sm:$0xc]
        %v3010 = vld [vmem:[%s2506 + $0x1c] sm:$0x3]
        %v3011 = vld [vmem:[%s2506 + $0x20] sm:$0xc]
        %v3012 = vld [vmem:[%s2506 + $0x24] sm:$0x3]
        %v3013 = vld [vmem:[%s2506 + $0x28] sm:$0xc]
        %v3014 = vld [vmem:[%s2506 + $0x2c] sm:$0x3]
        %v3015 = vld [vmem:[%s2506 + $0x30] sm:$0xc]
        %v3016 = vld [vmem:[%s2506 + $0x34] sm:$0x3]
        %v3017 = vld [vmem:[%s2506 + $0x38] sm:$0xc]
        %v3018 = vld [vmem:[%s2506 + $0x3c] sm:$0x3]
        %v3035 = vrot.slane %v3003, 6
        %v3036 = vrot.slane %v3035, 4
        %v3037 = vrot.slane %v3004, 6
        %v3038 = vsel %vm666, %v3036, %v3037
        %v3039 = vrot.slane %v3005, 6
        %v3040 = vrot.slane %v3039, 4
        %v3041 = vrot.slane %v3006, 6
        %v3042 = vsel %vm666, %v3040, %v3041
        %v3043 = vrot.slane %v3007, 6
        %v3044 = vrot.slane %v3043, 4
        %v3045 = vrot.slane %v3008, 6
        %v3046 = vsel %vm666, %v3044, %v3045
        %v3047 = vrot.slane %v3009, 6
        %v3048 = vrot.slane %v3047, 4
        %v3049 = vrot.slane %v3010, 6
        %v3050 = vsel %vm666, %v3048, %v3049
        %v3051 = vrot.slane %v3011, 6
        %v3052 = vrot.slane %v3051, 4
        %v3053 = vrot.slane %v3012, 6
        %v3054 = vsel %vm666, %v3052, %v3053
        %v3055 = vrot.slane %v3013, 6
        %v3056 = vrot.slane %v3055, 4
        %v3057 = vrot.slane %v3014, 6
        %v3058 = vsel %vm666, %v3056, %v3057
        %v3059 = vrot.slane %v3015, 6
        %v3060 = vrot.slane %v3059, 4
        %v3061 = vrot.slane %v3016, 6
        %v3062 = vsel %vm666, %v3060, %v3061
        %v3063 = vrot.slane %v3017, 6
        %v3064 = vrot.slane %v3063, 4
        %v3065 = vrot.slane %v3018, 6
        %v3066 = vsel %vm666, %v3064, %v3065
        %3067 = vrot.lane.b32.xlu0 %v3038, 64
        %v3068 = vpop.permute.xlu0 %3067
        %3069 = vrot.lane.b32.xlu0 %v3042, 64
        %v3070 = vpop.permute.xlu0 %3069
        %3071 = vrot.lane.b32.xlu0 %v3046, 64
        %v3072 = vpop.permute.xlu0 %3071
        %3073 = vrot.lane.b32.xlu0 %v3050, 64
        %v3074 = vpop.permute.xlu0 %3073
        %3075 = vrot.lane.b32.xlu0 %v3054, 64
        %v3076 = vpop.permute.xlu0 %3075
        %3077 = vrot.lane.b32.xlu0 %v3058, 64
        %v3078 = vpop.permute.xlu0 %3077
        %3079 = vrot.lane.b32.xlu0 %v3062, 64
        %v3080 = vpop.permute.xlu0 %3079
        %3081 = vrot.lane.b32.xlu0 %v3066, 64
        %v3082 = vpop.permute.xlu0 %3081
        %3091 = vst.msk [vmem:[#allocation2 + $0x4] sm:$0xf] %vm1224, %v3068
        %3092 = vst.msk [vmem:[#allocation2 + $0xc] sm:$0xf] %vm1224, %v3070
        %3093 = vst.msk [vmem:[#allocation2 + $0x14] sm:$0xf] %vm1224, %v3072
        %3094 = vst.msk [vmem:[#allocation2 + $0x1c] sm:$0xf] %vm1224, %v3074
        %3095 = vst.msk [vmem:[#allocation2 + $0x24] sm:$0xf] %vm1224, %v3076
        %3096 = vst.msk [vmem:[#allocation2 + $0x2c] sm:$0xf] %vm1224, %v3078
        %3097 = vst.msk [vmem:[#allocation2 + $0x34] sm:$0xf] %vm1224, %v3080
        %3098 = vst.msk [vmem:[#allocation2 + $0x3c] sm:$0xf] %vm1224, %v3082
        %v3099 = vld [vmem:[#allocation2] sm:$0xff]
        %v3100 = vld [vmem:[#allocation2 + $0x8] sm:$0xff]
        %v3101 = vld [vmem:[#allocation2 + $0x10] sm:$0xff]
        %v3102 = vld [vmem:[#allocation2 + $0x18] sm:$0xff]
        %v3103 = vld [vmem:[#allocation2 + $0x20] sm:$0xff]
        %v3104 = vld [vmem:[#allocation2 + $0x28] sm:$0xff]
        %v3105 = vld [vmem:[#allocation2 + $0x30] sm:$0xff]
        %v3106 = vld [vmem:[#allocation2 + $0x38] sm:$0xff]
        %v3107 = vld [vmem:[%s1] sm:$0xf]
        %v3108 = vld [vmem:[%s1 + $0x4] sm:$0xf]
        %v3109 = vld [vmem:[%s1 + $0x8] sm:$0xf]
        %v3110 = vld [vmem:[%s1 + $0xc] sm:$0xf]
        %v3111 = vld [vmem:[%s1 + $0x10] sm:$0xf]
        %v3112 = vld [vmem:[%s1 + $0x14] sm:$0xf]
        %v3113 = vld [vmem:[%s1 + $0x18] sm:$0xf]
        %v3114 = vld [vmem:[%s1 + $0x1c] sm:$0xf]
        %v3115 = vld [vmem:[%s1 + $0x20] sm:$0xf]
        %v3116 = vld [vmem:[%s1 + $0x24] sm:$0xf]
        %v3117 = vld [vmem:[%s1 + $0x28] sm:$0xf]
        %v3118 = vld [vmem:[%s1 + $0x2c] sm:$0xf]
        %v3119 = vld [vmem:[%s1 + $0x30] sm:$0xf]
        %v3120 = vld [vmem:[%s1 + $0x34] sm:$0xf]
        %v3121 = vld [vmem:[%s1 + $0x38] sm:$0xf]
        %v3122 = vld [vmem:[%s1 + $0x3c] sm:$0xf]
        %v3123 = vld [vmem:[%s1 + $0x40] sm:$0xf]
        %v3124 = vld [vmem:[%s1 + $0x44] sm:$0xf]
        %v3125 = vld [vmem:[%s1 + $0x48] sm:$0xf]
        %v3126 = vld [vmem:[%s1 + $0x4c] sm:$0xf]
        %v3127 = vld [vmem:[%s1 + $0x50] sm:$0xf]
        %v3128 = vld [vmem:[%s1 + $0x54] sm:$0xf]
        %v3129 = vld [vmem:[%s1 + $0x58] sm:$0xf]
        %v3130 = vld [vmem:[%s1 + $0x5c] sm:$0xf]
        %v3131 = vld [vmem:[%s1 + $0x60] sm:$0xf]
        %v3132 = vld [vmem:[%s1 + $0x64] sm:$0xf]
        %v3133 = vld [vmem:[%s1 + $0x68] sm:$0xf]
        %v3134 = vld [vmem:[%s1 + $0x6c] sm:$0xf]
        %v3135 = vld [vmem:[%s1 + $0x70] sm:$0xf]
        %v3136 = vld [vmem:[%s1 + $0x74] sm:$0xf]
        %v3137 = vld [vmem:[%s1 + $0x78] sm:$0xf]
        %v3138 = vld [vmem:[%s1 + $0x7c] sm:$0xf]
        %v3147 = vunpack.c.l.b16 %v3099
        %v3148 = vunpack.c.h.b16 %v3099
        %v3149 = vunpack.c.l.b16 %v3100
        %v3150 = vunpack.c.h.b16 %v3100
        %v3151 = vunpack.c.l.b16 %v3101
        %v3152 = vunpack.c.h.b16 %v3101
        %v3153 = vunpack.c.l.b16 %v3102
        %v3154 = vunpack.c.h.b16 %v3102
        %v3155 = vunpack.c.l.b16 %v3103
        %v3156 = vunpack.c.h.b16 %v3103
        %v3157 = vunpack.c.l.b16 %v3104
        %v3158 = vunpack.c.h.b16 %v3104
        %v3159 = vunpack.c.l.b16 %v3105
        %v3160 = vunpack.c.h.b16 %v3105
        %v3161 = vunpack.c.l.b16 %v3106
        %v3162 = vunpack.c.h.b16 %v3106
        %v3163 = vpack.c.b16 %v3149, %v3147
        %v3164 = vpack.c.b16 %v3150, %v3148
        %v3165 = vpack.c.b16 %v3153, %v3151
        %v3166 = vpack.c.b16 %v3154, %v3152
        %v3167 = vpack.c.b16 %v3157, %v3155
        %v3168 = vpack.c.b16 %v3158, %v3156
        %v3169 = vpack.c.b16 %v3161, %v3159
        %v3170 = vpack.c.b16 %v3162, %v3160
        %v3211 = vunpack.c.l.b16 %v3107
        %v3212 = vunpack.c.l.b16 %v3108
        %v3213 = vunpack.c.l.b16 %v3109
        %v3214 = vunpack.c.l.b16 %v3110
        %v3215 = vunpack.c.l.b16 %v3111
        %v3216 = vunpack.c.l.b16 %v3112
        %v3217 = vunpack.c.l.b16 %v3113
        %v3218 = vunpack.c.l.b16 %v3114
        %v3219 = vunpack.c.l.b16 %v3115
        %v3220 = vunpack.c.l.b16 %v3116
        %v3221 = vunpack.c.l.b16 %v3117
        %v3222 = vunpack.c.l.b16 %v3118
        %v3223 = vunpack.c.l.b16 %v3119
        %v3224 = vunpack.c.l.b16 %v3120
        %v3225 = vunpack.c.l.b16 %v3121
        %v3226 = vunpack.c.l.b16 %v3122
        %v3227 = vunpack.c.l.b16 %v3123
        %v3228 = vunpack.c.l.b16 %v3124
        %v3229 = vunpack.c.l.b16 %v3125
        %v3230 = vunpack.c.l.b16 %v3126
        %v3231 = vunpack.c.l.b16 %v3127
        %v3232 = vunpack.c.l.b16 %v3128
        %v3233 = vunpack.c.l.b16 %v3129
        %v3234 = vunpack.c.l.b16 %v3130
        %v3235 = vunpack.c.l.b16 %v3131
        %v3236 = vunpack.c.l.b16 %v3132
        %v3237 = vunpack.c.l.b16 %v3133
        %v3238 = vunpack.c.l.b16 %v3134
        %v3239 = vunpack.c.l.b16 %v3135
        %v3240 = vunpack.c.l.b16 %v3136
        %v3241 = vunpack.c.l.b16 %v3137
        %v3242 = vunpack.c.l.b16 %v3138
        %v3243 = vpack.c.b16 %v3212, %v3211
        %v3244 = vpack.c.b16 %v3214, %v3213
        %v3245 = vpack.c.b16 %v3216, %v3215
        %v3246 = vpack.c.b16 %v3218, %v3217
        %v3247 = vpack.c.b16 %v3220, %v3219
        %v3248 = vpack.c.b16 %v3222, %v3221
        %v3249 = vpack.c.b16 %v3224, %v3223
        %v3250 = vpack.c.b16 %v3226, %v3225
        %v3251 = vpack.c.b16 %v3228, %v3227
        %v3252 = vpack.c.b16 %v3230, %v3229
        %v3253 = vpack.c.b16 %v3232, %v3231
        %v3254 = vpack.c.b16 %v3234, %v3233
        %v3255 = vpack.c.b16 %v3236, %v3235
        %v3256 = vpack.c.b16 %v3238, %v3237
        %v3257 = vpack.c.b16 %v3240, %v3239
        %v3258 = vpack.c.b16 %v3242, %v3241
        %3275 = vmatpush.bf16.msra.mxu0 %v3250
        %3276 = vmatpush.bf16.msra.mxu0 %v3249
        %3277 = vmatpush.bf16.msra.mxu0 %v3248
        %3278 = vmatpush.bf16.msra.mxu0 %v3247
        %3279 = vmatpush.bf16.msra.mxu0 %v3246
        %3280 = vmatpush.bf16.msra.mxu0 %v3245
        %3281 = vmatpush.bf16.msra.mxu0 %v3244
        %3282 = vmatpush.bf16.msra.mxu0 %v3243
        %3283 = vmatmul.bf16.gmra.mxu0 %v3163
        %v3284 = vpop.f32.mrf.mxu0
        %v3285 = vadd.f32 0.0, %v3284
        %v3286 = vpop.f32.mrf.mxu0
        %v3287 = vadd.f32 0.0, %v3286
        %3288 = vmatmul.bf16.gmra.mxu0 %v3165
        %v3289 = vpop.f32.mrf.mxu0
        %v3290 = vadd.f32 0.0, %v3289
        %v3291 = vpop.f32.mrf.mxu0
        %v3292 = vadd.f32 0.0, %v3291
        %3293 = vmatmul.bf16.gmra.mxu0 %v3167
        %v3294 = vpop.f32.mrf.mxu0
        %v3295 = vadd.f32 0.0, %v3294
        %v3296 = vpop.f32.mrf.mxu0
        %v3297 = vadd.f32 0.0, %v3296
        %3298 = vmatmul.bf16.gmra.mxu0 %v3169
        %v3299 = vpop.f32.mrf.mxu0
        %v3300 = vadd.f32 0.0, %v3299
        %v3301 = vpop.f32.mrf.mxu0
        %v3302 = vadd.f32 0.0, %v3301
        %3303 = vdwg.mxu0
        %3304 = vmatpush.bf16.msra.mxu0 %v3258
        %3305 = vmatpush.bf16.msra.mxu0 %v3257
        %3306 = vmatpush.bf16.msra.mxu0 %v3256
        %3307 = vmatpush.bf16.msra.mxu0 %v3255
        %3308 = vmatpush.bf16.msra.mxu0 %v3254
        %3309 = vmatpush.bf16.msra.mxu0 %v3253
        %3310 = vmatpush.bf16.msra.mxu0 %v3252
        %3311 = vmatpush.bf16.msra.mxu0 %v3251
        %3312 = vmatmul.bf16.gmra.mxu0 %v3164
        %v3313 = vpop.f32.mrf.mxu0
        %v3314 = vadd.f32 %v3285, %v3313
        %v3315 = vpop.f32.mrf.mxu0
        %v3316 = vadd.f32 %v3287, %v3315
        %3317 = vmatmul.bf16.gmra.mxu0 %v3166
        %v3318 = vpop.f32.mrf.mxu0
        %v3319 = vadd.f32 %v3290, %v3318
        %v3320 = vpop.f32.mrf.mxu0
        %v3321 = vadd.f32 %v3292, %v3320
        %3322 = vmatmul.bf16.gmra.mxu0 %v3168
        %v3323 = vpop.f32.mrf.mxu0
        %v3324 = vadd.f32 %v3295, %v3323
        %v3325 = vpop.f32.mrf.mxu0
        %v3326 = vadd.f32 %v3297, %v3325
        %3327 = vmatmul.bf16.gmra.mxu0 %v3170
        %v3328 = vpop.f32.mrf.mxu0
        %v3329 = vadd.f32 %v3300, %v3328
        %v3330 = vpop.f32.mrf.mxu0
        %v3331 = vadd.f32 %v3302, %v3330
        %3332 = vdwg.mxu0
        %3333 = vst [vmem:[%s136] sm:$0xff] %v3314
        %3334 = vst [vmem:[%s136 + $0x8] sm:$0xff] %v3316
        %3335 = vst [vmem:[%s136 + $0x10] sm:$0xff] %v3319
        %3336 = vst [vmem:[%s136 + $0x18] sm:$0xff] %v3321
        %3337 = vst [vmem:[%s136 + $0x20] sm:$0xff] %v3324
        %3338 = vst [vmem:[%s136 + $0x28] sm:$0xff] %v3326
        %3339 = vst [vmem:[%s136 + $0x30] sm:$0xff] %v3329
        %3340 = vst [vmem:[%s136 + $0x38] sm:$0xff] %v3331
        %s3341 = sand.u32 %s71, 1
        %s3342 = scalar_lea.sflag [#allocation4], %s3341
        %s3343 = sand.u32 %s71, 1
        %s3344 = smul.addr %s3343, 64
        %s3345 = scalar_lea.vmem [#allocation3], %s3344
        // Predicated region
        $region33: #{tpu_custom_call.1} parent=27 // pred_check
          %p3346 = pneg %p81
        $region34: #{tpu_custom_call.1} parent=27 // pred_check_branch
          %3348 = sbr.rel (%p3346) target = $region36
        $region35: #{tpu_custom_call.1} parent=27 // pred_region
          %3350 = vsyncadd %s3342, 0
          %s3351 = smul.addr %s16, 8
          %s3352 = smul.addr %s3351, 8
          %s3353 = scalar_lea.hbm %s2, %s3352
          %s3354 = sshll.u32 %s3345, 4
          %s3355 = int_to_ptr.vmem [resolvable:$true] %s3354
          %s3356 = sshll.u32 %s3353, 4
          %s3357 = int_to_ptr.hbm [resolvable:$true] %s3356
          %3362 = dma.vmem_to_hbm [thread:$0]  %s3355, 1024, %s3357, %s3342, 128, 128, 8
        $region36: #{tpu_custom_call.1} parent=27 // pred_fallthru
          _
      $region28: #{tpu_custom_call.1} parent=5 // pred_fallthru
        _
      %p3363 = scmp.le.s32.totalorder 2, %s11
      // Predicated region
      $region37: #{tpu_custom_call.1} parent=5 // pred_check
        %p3364 = pneg %p3363
      $region38: #{tpu_custom_call.1} parent=5 // pred_check_branch
        %3366 = sbr.rel (%p3364) target = $region40
      $region39: #{tpu_custom_call.1} parent=5 // pred_region
        %s3367 = ssub.s32 %s11, 2
        // Predicated region
        $region41: #{tpu_custom_call.1} parent=39 // pred_check
          %p3368 = pneg %p87
        $region42: #{tpu_custom_call.1} parent=39 // pred_check_branch
          %3370 = sbr.rel (%p3368) target = $region44
        $region43: #{tpu_custom_call.1} parent=39 // pred_region
          %s3371 = sand.u32 %s72, 1
          %s3372 = scalar_lea.sflag [#allocation4], %s3371
          %s3373 = sand.u32 %s72, 1
          %s3374 = smul.addr %s3373, 64
          %s3375 = scalar_lea.vmem [#allocation3], %s3374
          %3377 = dma.done %s3372, 1024
        $region44: #{tpu_custom_call.1} parent=39 // pred_fallthru
          _
      $region40: #{tpu_custom_call.1} parent=5 // pred_fallthru
        _
    $region6: #{tpu_custom_call.1} parent=1 // loop_footer
      %s15 = sadd.s32 1, %s11
    $region7: #{tpu_custom_call.1} parent=1 // loop_footer_branch
      %10 = sbr.rel target = $region3
    $region8: #{tpu_custom_call.1} parent=1 // loop_exit
      _
    %3378 = vsyncpa [#allocation4], 1
    %s3379 = scalar_lea.sflag [#allocation4], 1
    %3380 = vsyncpa %s3379, 1

</llo_original>
